<compile_context>
chip_gen: v6e
topology: v6e:2x2x1
jax: 0.10.0
libtpu: 0.0.40
codegen_flags: <defaults>
</compile_context>

<pallas_src>
import functools

import numpy as np
import jax
import jax.numpy as jnp
from jax import lax
from jax.experimental import pallas as pl
from jax.experimental.pallas import tpu as pltpu

EPS = 1e-5                       # nn.BatchNorm1d default eps


def _round_up(x, m):
    return (x + m - 1) // m * m


def _vmem_limit_bytes():
    """Generation-aware scoped-VMEM budget: ~75% of physical, capped at 100 MiB
    (v5e/v6e: 128 MiB physical -> 96 MiB; v7x: 64 MiB physical -> 48 MiB)."""
    try:
        cap = pltpu.get_tpu_info().vmem_capacity_bytes
    except Exception:            # no TPU visible at import / API drift
        cap = 64 * 1024 * 1024
    return int(min(100 * 1024 * 1024, cap * 3 // 4))


VMEM_LIMIT = _vmem_limit_bytes()


# ---------------------------------------------------------------------------
# Pass 1: Conv1d as a folded-contraction MXU matmul + partial BN statistics.
#         Grid over batch tiles (independent -> "parallel").
# ---------------------------------------------------------------------------
def _conv_stats_kernel(x_ref, w_ref, y_ref, s1_ref, s2_ref, slab_ref, *, k_size, cin):
    """x_ref   : (tn, Cin, L)     f32  native NCL activation tile
       w_ref   : (Cout_p, KC_p)   bf16 folded weight (resident; constant index_map)
       y_ref   : (tn, Cout_p, L)  bf16 conv output tile (channels on sublanes)
       s1_ref  : (1, Cout_p, 1)   f32  per-tile sum over (tn, L)
       s2_ref  : (1, Cout_p, 1)   f32  per-tile sum of squares over (tn, L)
       slab_ref: (tn, KC_p, L)    bf16 im2col scratch; contraction on sublanes,
                                  L lane-dense -> wide tap stores.
    """
    tn, _, l = x_ref.shape
    cout_p = y_ref.shape[1]
    kc_p = slab_ref.shape[1]
    kc = k_size * cin
    pad = (k_size - 1) // 2

    x = x_ref[...].astype(jnp.bfloat16)        # cast activations to bf16 once

    # im2col slab, tap by tap.  Every slab element the matmul reads is
    # (re)written each grid step (tap data or explicit tiny zero slivers), so
    # no state persists across steps -> correct under megacore grid sharding.
    if kc_p > kc:                              # contraction zero-padding rows
        slab_ref[:, kc:kc_p, :] = jnp.zeros((tn, kc_p - kc, l), jnp.bfloat16)
    for dk in range(k_size):
        d = dk - pad                           # tap offset along L
        lo = min(l, max(0, -d))
        hi = max(lo, min(l, l - d))
        r0 = dk * cin
        if lo > 0:                             # left conv-boundary zeros (<= pad lanes)
            slab_ref[:, r0:r0 + cin, 0:lo] = jnp.zeros((tn, cin, lo), jnp.bfloat16)
        if hi < l:                             # right conv-boundary zeros
            slab_ref[:, r0:r0 + cin, hi:l] = jnp.zeros((tn, cin, l - hi), jnp.bfloat16)
        if hi > lo:                            # lane-wide tap store: Cin sublanes x ~L lanes
            slab_ref[:, r0:r0 + cin, lo:hi] = x[:, :, lo + d:hi + d]

    # One MXU matmul per batch element: (Cout_p, KC_p) @ (KC_p, L), bf16
    # operands / f32 accumulation.  BN statistics are taken from the f32
    # accumulator BEFORE the bf16 store of y.
    w = w_ref[...]
    s1 = jnp.zeros((cout_p, 1), jnp.float32)
    s2 = jnp.zeros((cout_p, 1), jnp.float32)
    for b in range(tn):
        y = jnp.dot(w, slab_ref[b], preferred_element_type=jnp.float32)   # (Cout_p, L)
        y_ref[b] = y.astype(y_ref.dtype)
        s1 = s1 + jnp.sum(y, axis=1, keepdims=True)
        s2 = s2 + jnp.sum(y * y, axis=1, keepdims=True)
    s1_ref[0] = s1
    s2_ref[0] = s2


# ---------------------------------------------------------------------------
# Pass 2: normalize + ReLU (purely HBM-bound), grid over batch tiles.
# ---------------------------------------------------------------------------
def _bn_relu_kernel(y_ref, scale_ref, shift_ref, o_ref):
    """y_ref: (tb, Cout_p, L) bf16; scale/shift: (1, Cout_p, 1) f32; o_ref f32."""
    y = y_ref[...].astype(jnp.float32)
    o_ref[...] = jnp.maximum(y * scale_ref[...] + shift_ref[...], 0.0)


# ---------------------------------------------------------------------------
# VMEM-budget-derived tile picker
# ---------------------------------------------------------------------------
def _pick_tile(n, per_unit_bytes, budget, max_units=None):
    """Largest divisor t of n such that the grid has >=2 steps (when n >= 2) and
    the per-step working set fits `budget`.  Prefers an even grid count so
    v7x's two TensorCores both get work on the 'parallel' axis."""
    feasible = []
    for t in range(1, n + 1):
        if n % t:
            continue
        if n >= 2 and n // t < 2:
            continue
        if t > 1 and t * per_unit_bytes > budget:
            continue
        if max_units is not None and t > 1 and t > max_units:
            continue
        feasible.append(t)
    if not feasible:
        return 1
    even = [t for t in feasible if (n // t) % 2 == 0]
    return max(even) if even else max(feasible)


# ---------------------------------------------------------------------------
# Wrapper
# ---------------------------------------------------------------------------
@functools.partial(jax.jit, static_argnames=("k_size",))
def conv_bn_relu(x_ncl, w_oik, gamma, beta, *, k_size):
    """Conv1d(k, stride=1, same-pad, bias=False) + training-mode BN + ReLU.

    x_ncl: (N, Cin, L) f32; w_oik: (Cout, Cin, K) f32 (PyTorch layout);
    gamma, beta: (Cout,) f32.  Returns (N, Cout, L) f32.
    """
    n, cin, l = x_ncl.shape
    cout = w_oik.shape[0]
    cout_p = _round_up(cout, 8)               # output channels live on sublanes
    kc = k_size * cin
    kc_p = _round_up(kc, 128)                 # lane-dense folded weight

    # Folded weight: w_fold[co, dk*cin + ci] = w_oik[co, ci, dk]; zero-pad the
    # contraction and Cout, cast once to bf16 (f32 MXU accumulation).
    w_fold = jnp.transpose(w_oik, (0, 2, 1)).reshape(cout, kc)
    w_fold = jnp.pad(w_fold, ((0, cout_p - cout), (0, kc_p - kc))).astype(jnp.bfloat16)

    budget = VMEM_LIMIT // 2                  # headroom for Mosaic internals

    # ---- Pass 1: conv + one-pass partial statistics -----------------------
    per_batch_p1 = (cin * l * 4) * 2 + (cout_p * l * 2) * 2 + kc_p * l * 2
    tn = _pick_tile(n, per_batch_p1, budget, max_units=16)
    n_tiles = n // tn

    conv_call = pl.pallas_call(
        functools.partial(_conv_stats_kernel, k_size=k_size, cin=cin),
        out_shape=(
            jax.ShapeDtypeStruct((n, cout_p, l), jnp.bfloat16),      # y (NCL, bf16)
            jax.ShapeDtypeStruct((n_tiles, cout_p, 1), jnp.float32),  # partial sums
            jax.ShapeDtypeStruct((n_tiles, cout_p, 1), jnp.float32),  # partial sum-sq
        ),
        grid_spec=pltpu.PrefetchScalarGridSpec(
            num_scalar_prefetch=0,
            grid=(n_tiles,),
            in_specs=[
                pl.BlockSpec((tn, cin, l), lambda i: (i, 0, 0)),
                pl.BlockSpec((cout_p, kc_p), lambda i: (0, 0)),       # resident weight
            ],
            out_specs=[
                pl.BlockSpec((tn, cout_p, l), lambda i: (i, 0, 0)),
                pl.BlockSpec((1, cout_p, 1), lambda i: (i, 0, 0)),
                pl.BlockSpec((1, cout_p, 1), lambda i: (i, 0, 0)),
            ],
            scratch_shapes=[pltpu.VMEM((tn, kc_p, l), jnp.bfloat16)],  # bf16 im2col slab
        ),
        compiler_params=pltpu.CompilerParams(
            dimension_semantics=("parallel",),
            vmem_limit_bytes=VMEM_LIMIT,
        ),
    )
    y, s1p, s2p = conv_call(x_ncl, w_fold)

    # Tiny O(Cout) glue: fold partial sums into per-channel scale/shift (f32).
    count = jnp.float32(n * l)
    mean = jnp.sum(s1p[:, :, 0], axis=0) / count
    var = jnp.sum(s2p[:, :, 0], axis=0) / count - mean * mean
    var = jnp.maximum(var, 0.0)               # cancellation guard (review)
    gamma_p = jnp.pad(gamma, (0, cout_p - cout), constant_values=1.0)
    beta_p = jnp.pad(beta, (0, cout_p - cout))
    inv = lax.rsqrt(var + EPS)
    scale = (gamma_p * inv).reshape(1, cout_p, 1)
    shift = (beta_p - mean * gamma_p * inv).reshape(1, cout_p, 1)

    # ---- Pass 2: y*scale + shift, ReLU -------------------------------------
    per_batch_p2 = cout_p * l * (2 + 4) * 2   # bf16 read + f32 write, double-buffered
    tb = _pick_tile(n, per_batch_p2, budget)
    bn_call = pl.pallas_call(
        _bn_relu_kernel,
        out_shape=jax.ShapeDtypeStruct((n, cout_p, l), jnp.float32),
        grid_spec=pltpu.PrefetchScalarGridSpec(
            num_scalar_prefetch=0,
            grid=(n // tb,),
            in_specs=[
                pl.BlockSpec((tb, cout_p, l), lambda i: (i, 0, 0)),
                pl.BlockSpec((1, cout_p, 1), lambda i: (0, 0, 0)),
                pl.BlockSpec((1, cout_p, 1), lambda i: (0, 0, 0)),
            ],
            out_specs=pl.BlockSpec((tb, cout_p, l), lambda i: (i, 0, 0)),
        ),
        compiler_params=pltpu.CompilerParams(
            dimension_semantics=("parallel",),
            vmem_limit_bytes=VMEM_LIMIT,
        ),
    )
    out = bn_call(y, scale, shift)

    # Output is already (N, Cout_p, L) NCL; drop channel padding only if needed
    # (for Cout a multiple of 8 this is a no-op and there is no extra HBM pass).
    if cout_p != cout:
        out = out[:, :cout, :]
    return out


# ---------------------------------------------------------------------------
# Plain-JAX reference (PyTorch semantics) for verification
# ---------------------------------------------------------------------------
def reference_conv_bn_relu(x_ncl, w_oik, gamma, beta):
    k = w_oik.shape[-1]
    pad = (k - 1) // 2
    y = lax.conv_general_dilated(
        x_ncl, w_oik, window_strides=(1,), padding=[(pad, pad)],
        dimension_numbers=("NCH", "OIH", "NCH"))
    mean = jnp.mean(y, axis=(0, 2), keepdims=True)
    var = jnp.mean((y - mean) ** 2, axis=(0, 2), keepdims=True)
    y = (y - mean) * lax.rsqrt(var + EPS) * gamma.reshape(1, -1, 1) + beta.reshape(1, -1, 1)
    return jnp.maximum(y, 0.0)


if __name__ == "__main__":
    # conv(in_ch=4, out_ch=8, k_size=25, stride=1, bias=False) at small shapes.
    N, Cin, Cout, L, K = 4, 4, 8, 64, 25

    key = jax.random.PRNGKey(0)
    kx, kw, kg, kb = jax.random.split(key, 4)
    x_ncl = jax.random.normal(kx, (N, Cin, L), jnp.float32)
    w_oik = 0.1 * jax.random.normal(kw, (Cout, Cin, K), jnp.float32)
    # Random BN affine params (see header note; real init is gamma=1, beta=0).
    gamma = 1.0 + 0.1 * jax.random.normal(kg, (Cout,), jnp.float32)
    beta = 0.1 * jax.random.normal(kb, (Cout,), jnp.float32)

    out = conv_bn_relu(x_ncl, w_oik, gamma, beta, k_size=K)
    out = jax.block_until_ready(out)

    ref = reference_conv_bn_relu(x_ncl, w_oik, gamma, beta)
    assert out.shape == (N, Cout, L)
    # bf16 MXU operands + bf16 intermediate y (f32 accumulation / f32 BN stats)
    # -> loosened tolerance.
    np.testing.assert_allclose(np.asarray(out), np.asarray(ref), atol=5e-2, rtol=5e-2)
    print("KERNEL_OK")
</pallas_src>

<mosaic_0001>
module attributes {stable_mosaic.version = 11 : i64} {
  func.func @_bn_relu_kernel(%arg0: i32, %arg1: memref<2x8x64xbf16, #tpu.memory_space<vmem>>, %arg2: memref<1x8x1xf32, #tpu.memory_space<vmem>>, %arg3: memref<1x8x1xf32, #tpu.memory_space<vmem>>, %arg4: memref<2x8x64xf32, #tpu.memory_space<vmem>>) attributes {dimension_semantics = [#tpu.dimension_semantics<parallel>], iteration_bounds = array<i64: 2>, scalar_prefetch = 0 : i64, scratch_operands = 0 : i64, tpu.core_type = #tpu.core_type<tc>, window_params = [{transform_indices = @transform_0, window_bounds = array<i64: 2, 8, 64>}, {pipeline_mode = #tpu.pipeline_mode<synchronous>, transform_indices = @transform_1, window_bounds = array<i64: 1, 8, 1>}, {pipeline_mode = #tpu.pipeline_mode<synchronous>, transform_indices = @transform_2, window_bounds = array<i64: 1, 8, 1>}, {transform_indices = @transform_3, window_bounds = array<i64: 2, 8, 64>}]} {
    %c0 = arith.constant 0 : index
    %c0_0 = arith.constant 0 : index
    %c0_1 = arith.constant 0 : index
    %0 = vector.load %arg1[%c0, %c0_0, %c0_1] : memref<2x8x64xbf16, #tpu.memory_space<vmem>>, vector<2x8x64xbf16>
    %1 = arith.extf %0 : vector<2x8x64xbf16> to vector<2x8x64xf32>
    %c0_2 = arith.constant 0 : index
    %c0_3 = arith.constant 0 : index
    %c0_4 = arith.constant 0 : index
    %2 = vector.load %arg2[%c0_2, %c0_3, %c0_4] : memref<1x8x1xf32, #tpu.memory_space<vmem>>, vector<1x8x1xf32>
    %3 = vector.broadcast %2 : vector<1x8x1xf32> to vector<2x8x64xf32>
    %4 = arith.mulf %1, %3 : vector<2x8x64xf32>
    %c0_5 = arith.constant 0 : index
    %c0_6 = arith.constant 0 : index
    %c0_7 = arith.constant 0 : index
    %5 = vector.load %arg3[%c0_5, %c0_6, %c0_7] : memref<1x8x1xf32, #tpu.memory_space<vmem>>, vector<1x8x1xf32>
    %6 = vector.broadcast %5 : vector<1x8x1xf32> to vector<2x8x64xf32>
    %7 = arith.addf %4, %6 : vector<2x8x64xf32>
    %cst = arith.constant 0.000000e+00 : f32
    %8 = vector.broadcast %cst : f32 to vector<2x8x64xf32>
    %9 = arith.maximumf %7, %8 : vector<2x8x64xf32>
    %c0_8 = arith.constant 0 : index
    %c0_9 = arith.constant 0 : index
    %c0_10 = arith.constant 0 : index
    %10 = vector.load %arg4[%c0_8, %c0_9, %c0_10] : memref<2x8x64xf32, #tpu.memory_space<vmem>>, vector<2x8x64xf32>
    tpu.vector_store %arg4[%c0_8, %c0_9, %c0_10], %9 {strides = array<i32>} : memref<2x8x64xf32, #tpu.memory_space<vmem>>, vector<2x8x64xf32>,
    return
  }
  func.func @transform_0(%arg0: i32) -> (i32, i32, i32) {
    %c0_i32 = arith.constant 0 : i32
    %c0_i32_0 = arith.constant 0 : i32
    %c0_i32_1 = arith.constant 0 : i32
    return %arg0, %c0_i32, %c0_i32_0 : i32, i32, i32
  }
  func.func @transform_1(%arg0: i32) -> (i32, i32, i32) {
    %c0_i32 = arith.constant 0 : i32
    %c0_i32_0 = arith.constant 0 : i32
    %c0_i32_1 = arith.constant 0 : i32
    %c0_i32_2 = arith.constant 0 : i32
    return %c0_i32, %c0_i32_0, %c0_i32_1 : i32, i32, i32
  }
  func.func @transform_2(%arg0: i32) -> (i32, i32, i32) {
    %c0_i32 = arith.constant 0 : i32
    %c0_i32_0 = arith.constant 0 : i32
    %c0_i32_1 = arith.constant 0 : i32
    %c0_i32_2 = arith.constant 0 : i32
    return %c0_i32, %c0_i32_0, %c0_i32_1 : i32, i32, i32
  }
  func.func @transform_3(%arg0: i32) -> (i32, i32, i32) {
    %c0_i32 = arith.constant 0 : i32
    %c0_i32_0 = arith.constant 0 : i32
    %c0_i32_1 = arith.constant 0 : i32
    return %arg0, %c0_i32, %c0_i32_0 : i32, i32, i32
  }
}

module attributes {stable_mosaic.version = 11 : i64} {
  func.func @_conv_stats_kernel(%arg0: i32, %arg1: memref<2x4x64xf32, #tpu.memory_space<vmem>>, %arg2: memref<8x128xbf16, #tpu.memory_space<vmem>>, %arg3: memref<2x8x64xbf16, #tpu.memory_space<vmem>>, %arg4: memref<1x8x1xf32, #tpu.memory_space<vmem>>, %arg5: memref<1x8x1xf32, #tpu.memory_space<vmem>>, %arg6: memref<2x128x64xbf16, #tpu.memory_space<vmem>>) attributes {dimension_semantics = [#tpu.dimension_semantics<parallel>], iteration_bounds = array<i64: 2>, scalar_prefetch = 0 : i64, scratch_operands = 1 : i64, tpu.core_type = #tpu.core_type<tc>, window_params = [{transform_indices = @transform_0, window_bounds = array<i64: 2, 4, 64>}, {pipeline_mode = #tpu.pipeline_mode<synchronous>, transform_indices = @transform_1, window_bounds = array<i64: 8, 128>}, {transform_indices = @transform_2, window_bounds = array<i64: 2, 8, 64>}, {transform_indices = @transform_3, window_bounds = array<i64: 1, 8, 1>}, {transform_indices = @transform_4, window_bounds = array<i64: 1, 8, 1>}]} {
    %c0 = arith.constant 0 : index
    %c0_0 = arith.constant 0 : index
    %c0_1 = arith.constant 0 : index
    %0 = vector.load %arg1[%c0, %c0_0, %c0_1] : memref<2x4x64xf32, #tpu.memory_space<vmem>>, vector<2x4x64xf32>
    %1 = arith.truncf %0 : vector<2x4x64xf32> to vector<2x4x64xbf16>
    %cst = arith.constant 0.000000e+00 : bf16
    %2 = vector.broadcast %cst : bf16 to vector<2x28x64xbf16>
    %c0_2 = arith.constant 0 : index
    %c100 = arith.constant 100 : index
    %c0_3 = arith.constant 0 : index
    %3 = vector.load %arg6[%c0_2, %c100, %c0_3] : memref<2x128x64xbf16, #tpu.memory_space<vmem>>, vector<2x28x64xbf16>
    tpu.vector_store %arg6[%c0_2, %c100, %c0_3], %2 {strides = array<i32>} : memref<2x128x64xbf16, #tpu.memory_space<vmem>>, vector<2x28x64xbf16>,
    %cst_4 = arith.constant 0.000000e+00 : bf16
    %4 = vector.broadcast %cst_4 : bf16 to vector<2x4x12xbf16>
    %c0_5 = arith.constant 0 : index
    %c0_6 = arith.constant 0 : index
    %c0_7 = arith.constant 0 : index
    %5 = vector.load %arg6[%c0_5, %c0_6, %c0_7] : memref<2x128x64xbf16, #tpu.memory_space<vmem>>, vector<2x4x12xbf16>
    tpu.vector_store %arg6[%c0_5, %c0_6, %c0_7], %4 {strides = array<i32>} : memref<2x128x64xbf16, #tpu.memory_space<vmem>>, vector<2x4x12xbf16>,
    %6 = vector.extract_strided_slice %1 {offsets = [0, 0, 0], sizes = [2, 4, 52], strides = [1, 1, 1]} : vector<2x4x64xbf16> to vector<2x4x52xbf16>
    %c0_8 = arith.constant 0 : index
    %c0_9 = arith.constant 0 : index
    %c12 = arith.constant 12 : index
    %7 = vector.load %arg6[%c0_8, %c0_9, %c12] : memref<2x128x64xbf16, #tpu.memory_space<vmem>>, vector<2x4x52xbf16>
    tpu.vector_store %arg6[%c0_8, %c0_9, %c12], %6 {strides = array<i32>} : memref<2x128x64xbf16, #tpu.memory_space<vmem>>, vector<2x4x52xbf16>,
    %cst_10 = arith.constant 0.000000e+00 : bf16
    %8 = vector.broadcast %cst_10 : bf16 to vector<2x4x11xbf16>
    %c0_11 = arith.constant 0 : index
    %c4 = arith.constant 4 : index
    %c0_12 = arith.constant 0 : index
    %9 = vector.load %arg6[%c0_11, %c4, %c0_12] : memref<2x128x64xbf16, #tpu.memory_space<vmem>>, vector<2x4x11xbf16>
    tpu.vector_store %arg6[%c0_11, %c4, %c0_12], %8 {strides = array<i32>} : memref<2x128x64xbf16, #tpu.memory_space<vmem>>, vector<2x4x11xbf16>,
    %10 = vector.extract_strided_slice %1 {offsets = [0, 0, 0], sizes = [2, 4, 53], strides = [1, 1, 1]} : vector<2x4x64xbf16> to vector<2x4x53xbf16>
    %c0_13 = arith.constant 0 : index
    %c4_14 = arith.constant 4 : index
    %c11 = arith.constant 11 : index
    %11 = vector.load %arg6[%c0_13, %c4_14, %c11] : memref<2x128x64xbf16, #tpu.memory_space<vmem>>, vector<2x4x53xbf16>
    tpu.vector_store %arg6[%c0_13, %c4_14, %c11], %10 {strides = array<i32>} : memref<2x128x64xbf16, #tpu.memory_space<vmem>>, vector<2x4x53xbf16>,
    %cst_15 = arith.constant 0.000000e+00 : bf16
    %12 = vector.broadcast %cst_15 : bf16 to vector<2x4x10xbf16>
    %c0_16 = arith.constant 0 : index
    %c8 = arith.constant 8 : index
    %c0_17 = arith.constant 0 : index
    %13 = vector.load %arg6[%c0_16, %c8, %c0_17] : memref<2x128x64xbf16, #tpu.memory_space<vmem>>, vector<2x4x10xbf16>
    tpu.vector_store %arg6[%c0_16, %c8, %c0_17], %12 {strides = array<i32>} : memref<2x128x64xbf16, #tpu.memory_space<vmem>>, vector<2x4x10xbf16>,
    %14 = vector.extract_strided_slice %1 {offsets = [0, 0, 0], sizes = [2, 4, 54], strides = [1, 1, 1]} : vector<2x4x64xbf16> to vector<2x4x54xbf16>
    %c0_18 = arith.constant 0 : index
    %c8_19 = arith.constant 8 : index
    %c10 = arith.constant 10 : index
    %15 = vector.load %arg6[%c0_18, %c8_19, %c10] : memref<2x128x64xbf16, #tpu.memory_space<vmem>>, vector<2x4x54xbf16>
    tpu.vector_store %arg6[%c0_18, %c8_19, %c10], %14 {strides = array<i32>} : memref<2x128x64xbf16, #tpu.memory_space<vmem>>, vector<2x4x54xbf16>,
    %cst_20 = arith.constant 0.000000e+00 : bf16
    %16 = vector.broadcast %cst_20 : bf16 to vector<2x4x9xbf16>
    %c0_21 = arith.constant 0 : index
    %c12_22 = arith.constant 12 : index
    %c0_23 = arith.constant 0 : index
    %17 = vector.load %arg6[%c0_21, %c12_22, %c0_23] : memref<2x128x64xbf16, #tpu.memory_space<vmem>>, vector<2x4x9xbf16>
    tpu.vector_store %arg6[%c0_21, %c12_22, %c0_23], %16 {strides = array<i32>} : memref<2x128x64xbf16, #tpu.memory_space<vmem>>, vector<2x4x9xbf16>,
    %18 = vector.extract_strided_slice %1 {offsets = [0, 0, 0], sizes = [2, 4, 55], strides = [1, 1, 1]} : vector<2x4x64xbf16> to vector<2x4x55xbf16>
    %c0_24 = arith.constant 0 : index
    %c12_25 = arith.constant 12 : index
    %c9 = arith.constant 9 : index
    %19 = vector.load %arg6[%c0_24, %c12_25, %c9] : memref<2x128x64xbf16, #tpu.memory_space<vmem>>, vector<2x4x55xbf16>
    tpu.vector_store %arg6[%c0_24, %c12_25, %c9], %18 {strides = array<i32>} : memref<2x128x64xbf16, #tpu.memory_space<vmem>>, vector<2x4x55xbf16>,
    %cst_26 = arith.constant 0.000000e+00 : bf16
    %20 = vector.broadcast %cst_26 : bf16 to vector<2x4x8xbf16>
    %c0_27 = arith.constant 0 : index
    %c16 = arith.constant 16 : index
    %c0_28 = arith.constant 0 : index
    %21 = vector.load %arg6[%c0_27, %c16, %c0_28] : memref<2x128x64xbf16, #tpu.memory_space<vmem>>, vector<2x4x8xbf16>
    tpu.vector_store %arg6[%c0_27, %c16, %c0_28], %20 {strides = array<i32>} : memref<2x128x64xbf16, #tpu.memory_space<vmem>>, vector<2x4x8xbf16>,
    %22 = vector.extract_strided_slice %1 {offsets = [0, 0, 0], sizes = [2, 4, 56], strides = [1, 1, 1]} : vector<2x4x64xbf16> to vector<2x4x56xbf16>
    %c0_29 = arith.constant 0 : index
    %c16_30 = arith.constant 16 : index
    %c8_31 = arith.constant 8 : index
    %23 = vector.load %arg6[%c0_29, %c16_30, %c8_31] : memref<2x128x64xbf16, #tpu.memory_space<vmem>>, vector<2x4x56xbf16>
    tpu.vector_store %arg6[%c0_29, %c16_30, %c8_31], %22 {strides = array<i32>} : memref<2x128x64xbf16, #tpu.memory_space<vmem>>, vector<2x4x56xbf16>,
    %cst_32 = arith.constant 0.000000e+00 : bf16
    %24 = vector.broadcast %cst_32 : bf16 to vector<2x4x7xbf16>
    %c0_33 = arith.constant 0 : index
    %c20 = arith.constant 20 : index
    %c0_34 = arith.constant 0 : index
    %25 = vector.load %arg6[%c0_33, %c20, %c0_34] : memref<2x128x64xbf16, #tpu.memory_space<vmem>>, vector<2x4x7xbf16>
    tpu.vector_store %arg6[%c0_33, %c20, %c0_34], %24 {strides = array<i32>} : memref<2x128x64xbf16, #tpu.memory_space<vmem>>, vector<2x4x7xbf16>,
    %26 = vector.extract_strided_slice %1 {offsets = [0, 0, 0], sizes = [2, 4, 57], strides = [1, 1, 1]} : vector<2x4x64xbf16> to vector<2x4x57xbf16>
    %c0_35 = arith.constant 0 : index
    %c20_36 = arith.constant 20 : index
    %c7 = arith.constant 7 : index
    %27 = vector.load %arg6[%c0_35, %c20_36, %c7] : memref<2x128x64xbf16, #tpu.memory_space<vmem>>, vector<2x4x57xbf16>
    tpu.vector_store %arg6[%c0_35, %c20_36, %c7], %26 {strides = array<i32>} : memref<2x128x64xbf16, #tpu.memory_space<vmem>>, vector<2x4x57xbf16>,
    %cst_37 = arith.constant 0.000000e+00 : bf16
    %28 = vector.broadcast %cst_37 : bf16 to vector<2x4x6xbf16>
    %c0_38 = arith.constant 0 : index
    %c24 = arith.constant 24 : index
    %c0_39 = arith.constant 0 : index
    %29 = vector.load %arg6[%c0_38, %c24, %c0_39] : memref<2x128x64xbf16, #tpu.memory_space<vmem>>, vector<2x4x6xbf16>
    tpu.vector_store %arg6[%c0_38, %c24, %c0_39], %28 {strides = array<i32>} : memref<2x128x64xbf16, #tpu.memory_space<vmem>>, vector<2x4x6xbf16>,
    %30 = vector.extract_strided_slice %1 {offsets = [0, 0, 0], sizes = [2, 4, 58], strides = [1, 1, 1]} : vector<2x4x64xbf16> to vector<2x4x58xbf16>
    %c0_40 = arith.constant 0 : index
    %c24_41 = arith.constant 24 : index
    %c6 = arith.constant 6 : index
    %31 = vector.load %arg6[%c0_40, %c24_41, %c6] : memref<2x128x64xbf16, #tpu.memory_space<vmem>>, vector<2x4x58xbf16>
    tpu.vector_store %arg6[%c0_40, %c24_41, %c6], %30 {strides = array<i32>} : memref<2x128x64xbf16, #tpu.memory_space<vmem>>, vector<2x4x58xbf16>,
    %cst_42 = arith.constant 0.000000e+00 : bf16
    %32 = vector.broadcast %cst_42 : bf16 to vector<2x4x5xbf16>
    %c0_43 = arith.constant 0 : index
    %c28 = arith.constant 28 : index
    %c0_44 = arith.constant 0 : index
    %33 = vector.load %arg6[%c0_43, %c28, %c0_44] : memref<2x128x64xbf16, #tpu.memory_space<vmem>>, vector<2x4x5xbf16>
    tpu.vector_store %arg6[%c0_43, %c28, %c0_44], %32 {strides = array<i32>} : memref<2x128x64xbf16, #tpu.memory_space<vmem>>, vector<2x4x5xbf16>,
    %34 = vector.extract_strided_slice %1 {offsets = [0, 0, 0], sizes = [2, 4, 59], strides = [1, 1, 1]} : vector<2x4x64xbf16> to vector<2x4x59xbf16>
    %c0_45 = arith.constant 0 : index
    %c28_46 = arith.constant 28 : index
    %c5 = arith.constant 5 : index
    %35 = vector.load %arg6[%c0_45, %c28_46, %c5] : memref<2x128x64xbf16, #tpu.memory_space<vmem>>, vector<2x4x59xbf16>
    tpu.vector_store %arg6[%c0_45, %c28_46, %c5], %34 {strides = array<i32>} : memref<2x128x64xbf16, #tpu.memory_space<vmem>>, vector<2x4x59xbf16>,
    %cst_47 = arith.constant 0.000000e+00 : bf16
    %36 = vector.broadcast %cst_47 : bf16 to vector<2x4x4xbf16>
    %c0_48 = arith.constant 0 : index
    %c32 = arith.constant 32 : index
    %c0_49 = arith.constant 0 : index
    %37 = vector.load %arg6[%c0_48, %c32, %c0_49] : memref<2x128x64xbf16, #tpu.memory_space<vmem>>, vector<2x4x4xbf16>
    tpu.vector_store %arg6[%c0_48, %c32, %c0_49], %36 {strides = array<i32>} : memref<2x128x64xbf16, #tpu.memory_space<vmem>>, vector<2x4x4xbf16>,
    %38 = vector.extract_strided_slice %1 {offsets = [0, 0, 0], sizes = [2, 4, 60], strides = [1, 1, 1]} : vector<2x4x64xbf16> to vector<2x4x60xbf16>
    %c0_50 = arith.constant 0 : index
    %c32_51 = arith.constant 32 : index
    %c4_52 = arith.constant 4 : index
    %39 = vector.load %arg6[%c0_50, %c32_51, %c4_52] : memref<2x128x64xbf16, #tpu.memory_space<vmem>>, vector<2x4x60xbf16>
    tpu.vector_store %arg6[%c0_50, %c32_51, %c4_52], %38 {strides = array<i32>} : memref<2x128x64xbf16, #tpu.memory_space<vmem>>, vector<2x4x60xbf16>,
    %cst_53 = arith.constant 0.000000e+00 : bf16
    %40 = vector.broadcast %cst_53 : bf16 to vector<2x4x3xbf16>
    %c0_54 = arith.constant 0 : index
    %c36 = arith.constant 36 : index
    %c0_55 = arith.constant 0 : index
    %41 = vector.load %arg6[%c0_54, %c36, %c0_55] : memref<2x128x64xbf16, #tpu.memory_space<vmem>>, vector<2x4x3xbf16>
    tpu.vector_store %arg6[%c0_54, %c36, %c0_55], %40 {strides = array<i32>} : memref<2x128x64xbf16, #tpu.memory_space<vmem>>, vector<2x4x3xbf16>,
    %42 = vector.extract_strided_slice %1 {offsets = [0, 0, 0], sizes = [2, 4, 61], strides = [1, 1, 1]} : vector<2x4x64xbf16> to vector<2x4x61xbf16>
    %c0_56 = arith.constant 0 : index
    %c36_57 = arith.constant 36 : index
    %c3 = arith.constant 3 : index
    %43 = vector.load %arg6[%c0_56, %c36_57, %c3] : memref<2x128x64xbf16, #tpu.memory_space<vmem>>, vector<2x4x61xbf16>
    tpu.vector_store %arg6[%c0_56, %c36_57, %c3], %42 {strides = array<i32>} : memref<2x128x64xbf16, #tpu.memory_space<vmem>>, vector<2x4x61xbf16>,
    %cst_58 = arith.constant 0.000000e+00 : bf16
    %44 = vector.broadcast %cst_58 : bf16 to vector<2x4x2xbf16>
    %c0_59 = arith.constant 0 : index
    %c40 = arith.constant 40 : index
    %c0_60 = arith.constant 0 : index
    %45 = vector.load %arg6[%c0_59, %c40, %c0_60] : memref<2x128x64xbf16, #tpu.memory_space<vmem>>, vector<2x4x2xbf16>
    tpu.vector_store %arg6[%c0_59, %c40, %c0_60], %44 {strides = array<i32>} : memref<2x128x64xbf16, #tpu.memory_space<vmem>>, vector<2x4x2xbf16>,
    %46 = vector.extract_strided_slice %1 {offsets = [0, 0, 0], sizes = [2, 4, 62], strides = [1, 1, 1]} : vector<2x4x64xbf16> to vector<2x4x62xbf16>
    %c0_61 = arith.constant 0 : index
    %c40_62 = arith.constant 40 : index
    %c2 = arith.constant 2 : index
    %47 = vector.load %arg6[%c0_61, %c40_62, %c2] : memref<2x128x64xbf16, #tpu.memory_space<vmem>>, vector<2x4x62xbf16>
    tpu.vector_store %arg6[%c0_61, %c40_62, %c2], %46 {strides = array<i32>} : memref<2x128x64xbf16, #tpu.memory_space<vmem>>, vector<2x4x62xbf16>,
    %cst_63 = arith.constant 0.000000e+00 : bf16
    %48 = vector.broadcast %cst_63 : bf16 to vector<2x4x1xbf16>
    %c0_64 = arith.constant 0 : index
    %c44 = arith.constant 44 : index
    %c0_65 = arith.constant 0 : index
    %49 = vector.load %arg6[%c0_64, %c44, %c0_65] : memref<2x128x64xbf16, #tpu.memory_space<vmem>>, vector<2x4x1xbf16>
    tpu.vector_store %arg6[%c0_64, %c44, %c0_65], %48 {strides = array<i32>} : memref<2x128x64xbf16, #tpu.memory_space<vmem>>, vector<2x4x1xbf16>,
    %50 = vector.extract_strided_slice %1 {offsets = [0, 0, 0], sizes = [2, 4, 63], strides = [1, 1, 1]} : vector<2x4x64xbf16> to vector<2x4x63xbf16>
    %c0_66 = arith.constant 0 : index
    %c44_67 = arith.constant 44 : index
    %c1 = arith.constant 1 : index
    %51 = vector.load %arg6[%c0_66, %c44_67, %c1] : memref<2x128x64xbf16, #tpu.memory_space<vmem>>, vector<2x4x63xbf16>
    tpu.vector_store %arg6[%c0_66, %c44_67, %c1], %50 {strides = array<i32>} : memref<2x128x64xbf16, #tpu.memory_space<vmem>>, vector<2x4x63xbf16>,
    %c0_68 = arith.constant 0 : index
    %c48 = arith.constant 48 : index
    %c0_69 = arith.constant 0 : index
    %52 = vector.load %arg6[%c0_68, %c48, %c0_69] : memref<2x128x64xbf16, #tpu.memory_space<vmem>>, vector<2x4x64xbf16>
    tpu.vector_store %arg6[%c0_68, %c48, %c0_69], %1 {strides = array<i32>} : memref<2x128x64xbf16, #tpu.memory_space<vmem>>, vector<2x4x64xbf16>,
    %cst_70 = arith.constant 0.000000e+00 : bf16
    %53 = vector.broadcast %cst_70 : bf16 to vector<2x4x1xbf16>
    %c0_71 = arith.constant 0 : index
    %c52 = arith.constant 52 : index
    %c63 = arith.constant 63 : index
    %54 = vector.load %arg6[%c0_71, %c52, %c63] : memref<2x128x64xbf16, #tpu.memory_space<vmem>>, vector<2x4x1xbf16>
    tpu.vector_store %arg6[%c0_71, %c52, %c63], %53 {strides = array<i32>} : memref<2x128x64xbf16, #tpu.memory_space<vmem>>, vector<2x4x1xbf16>,
    %55 = vector.extract_strided_slice %1 {offsets = [0, 0, 1], sizes = [2, 4, 63], strides = [1, 1, 1]} : vector<2x4x64xbf16> to vector<2x4x63xbf16>
    %c0_72 = arith.constant 0 : index
    %c52_73 = arith.constant 52 : index
    %c0_74 = arith.constant 0 : index
    %56 = vector.load %arg6[%c0_72, %c52_73, %c0_74] : memref<2x128x64xbf16, #tpu.memory_space<vmem>>, vector<2x4x63xbf16>
    tpu.vector_store %arg6[%c0_72, %c52_73, %c0_74], %55 {strides = array<i32>} : memref<2x128x64xbf16, #tpu.memory_space<vmem>>, vector<2x4x63xbf16>,
    %cst_75 = arith.constant 0.000000e+00 : bf16
    %57 = vector.broadcast %cst_75 : bf16 to vector<2x4x2xbf16>
    %c0_76 = arith.constant 0 : index
    %c56 = arith.constant 56 : index
    %c62 = arith.constant 62 : index
    %58 = vector.load %arg6[%c0_76, %c56, %c62] : memref<2x128x64xbf16, #tpu.memory_space<vmem>>, vector<2x4x2xbf16>
    tpu.vector_store %arg6[%c0_76, %c56, %c62], %57 {strides = array<i32>} : memref<2x128x64xbf16, #tpu.memory_space<vmem>>, vector<2x4x2xbf16>,
    %59 = vector.extract_strided_slice %1 {offsets = [0, 0, 2], sizes = [2, 4, 62], strides = [1, 1, 1]} : vector<2x4x64xbf16> to vector<2x4x62xbf16>
    %c0_77 = arith.constant 0 : index
    %c56_78 = arith.constant 56 : index
    %c0_79 = arith.constant 0 : index
    %60 = vector.load %arg6[%c0_77, %c56_78, %c0_79] : memref<2x128x64xbf16, #tpu.memory_space<vmem>>, vector<2x4x62xbf16>
    tpu.vector_store %arg6[%c0_77, %c56_78, %c0_79], %59 {strides = array<i32>} : memref<2x128x64xbf16, #tpu.memory_space<vmem>>, vector<2x4x62xbf16>,
    %cst_80 = arith.constant 0.000000e+00 : bf16
    %61 = vector.broadcast %cst_80 : bf16 to vector<2x4x3xbf16>
    %c0_81 = arith.constant 0 : index
    %c60 = arith.constant 60 : index
    %c61 = arith.constant 61 : index
    %62 = vector.load %arg6[%c0_81, %c60, %c61] : memref<2x128x64xbf16, #tpu.memory_space<vmem>>, vector<2x4x3xbf16>
    tpu.vector_store %arg6[%c0_81, %c60, %c61], %61 {strides = array<i32>} : memref<2x128x64xbf16, #tpu.memory_space<vmem>>, vector<2x4x3xbf16>,
    %63 = vector.extract_strided_slice %1 {offsets = [0, 0, 3], sizes = [2, 4, 61], strides = [1, 1, 1]} : vector<2x4x64xbf16> to vector<2x4x61xbf16>
    %c0_82 = arith.constant 0 : index
    %c60_83 = arith.constant 60 : index
    %c0_84 = arith.constant 0 : index
    %64 = vector.load %arg6[%c0_82, %c60_83, %c0_84] : memref<2x128x64xbf16, #tpu.memory_space<vmem>>, vector<2x4x61xbf16>
    tpu.vector_store %arg6[%c0_82, %c60_83, %c0_84], %63 {strides = array<i32>} : memref<2x128x64xbf16, #tpu.memory_space<vmem>>, vector<2x4x61xbf16>,
    %cst_85 = arith.constant 0.000000e+00 : bf16
    %65 = vector.broadcast %cst_85 : bf16 to vector<2x4x4xbf16>
    %c0_86 = arith.constant 0 : index
    %c64 = arith.constant 64 : index
    %c60_87 = arith.constant 60 : index
    %66 = vector.load %arg6[%c0_86, %c64, %c60_87] : memref<2x128x64xbf16, #tpu.memory_space<vmem>>, vector<2x4x4xbf16>
    tpu.vector_store %arg6[%c0_86, %c64, %c60_87], %65 {strides = array<i32>} : memref<2x128x64xbf16, #tpu.memory_space<vmem>>, vector<2x4x4xbf16>,
    %67 = vector.extract_strided_slice %1 {offsets = [0, 0, 4], sizes = [2, 4, 60], strides = [1, 1, 1]} : vector<2x4x64xbf16> to vector<2x4x60xbf16>
    %c0_88 = arith.constant 0 : index
    %c64_89 = arith.constant 64 : index
    %c0_90 = arith.constant 0 : index
    %68 = vector.load %arg6[%c0_88, %c64_89, %c0_90] : memref<2x128x64xbf16, #tpu.memory_space<vmem>>, vector<2x4x60xbf16>
    tpu.vector_store %arg6[%c0_88, %c64_89, %c0_90], %67 {strides = array<i32>} : memref<2x128x64xbf16, #tpu.memory_space<vmem>>, vector<2x4x60xbf16>,
    %cst_91 = arith.constant 0.000000e+00 : bf16
    %69 = vector.broadcast %cst_91 : bf16 to vector<2x4x5xbf16>
    %c0_92 = arith.constant 0 : index
    %c68 = arith.constant 68 : index
    %c59 = arith.constant 59 : index
    %70 = vector.load %arg6[%c0_92, %c68, %c59] : memref<2x128x64xbf16, #tpu.memory_space<vmem>>, vector<2x4x5xbf16>
    tpu.vector_store %arg6[%c0_92, %c68, %c59], %69 {strides = array<i32>} : memref<2x128x64xbf16, #tpu.memory_space<vmem>>, vector<2x4x5xbf16>,
    %71 = vector.extract_strided_slice %1 {offsets = [0, 0, 5], sizes = [2, 4, 59], strides = [1, 1, 1]} : vector<2x4x64xbf16> to vector<2x4x59xbf16>
    %c0_93 = arith.constant 0 : index
    %c68_94 = arith.constant 68 : index
    %c0_95 = arith.constant 0 : index
    %72 = vector.load %arg6[%c0_93, %c68_94, %c0_95] : memref<2x128x64xbf16, #tpu.memory_space<vmem>>, vector<2x4x59xbf16>
    tpu.vector_store %arg6[%c0_93, %c68_94, %c0_95], %71 {strides = array<i32>} : memref<2x128x64xbf16, #tpu.memory_space<vmem>>, vector<2x4x59xbf16>,
    %cst_96 = arith.constant 0.000000e+00 : bf16
    %73 = vector.broadcast %cst_96 : bf16 to vector<2x4x6xbf16>
    %c0_97 = arith.constant 0 : index
    %c72 = arith.constant 72 : index
    %c58 = arith.constant 58 : index
    %74 = vector.load %arg6[%c0_97, %c72, %c58] : memref<2x128x64xbf16, #tpu.memory_space<vmem>>, vector<2x4x6xbf16>
    tpu.vector_store %arg6[%c0_97, %c72, %c58], %73 {strides = array<i32>} : memref<2x128x64xbf16, #tpu.memory_space<vmem>>, vector<2x4x6xbf16>,
    %75 = vector.extract_strided_slice %1 {offsets = [0, 0, 6], sizes = [2, 4, 58], strides = [1, 1, 1]} : vector<2x4x64xbf16> to vector<2x4x58xbf16>
    %c0_98 = arith.constant 0 : index
    %c72_99 = arith.constant 72 : index
    %c0_100 = arith.constant 0 : index
    %76 = vector.load %arg6[%c0_98, %c72_99, %c0_100] : memref<2x128x64xbf16, #tpu.memory_space<vmem>>, vector<2x4x58xbf16>
    tpu.vector_store %arg6[%c0_98, %c72_99, %c0_100], %75 {strides = array<i32>} : memref<2x128x64xbf16, #tpu.memory_space<vmem>>, vector<2x4x58xbf16>,
    %cst_101 = arith.constant 0.000000e+00 : bf16
    %77 = vector.broadcast %cst_101 : bf16 to vector<2x4x7xbf16>
    %c0_102 = arith.constant 0 : index
    %c76 = arith.constant 76 : index
    %c57 = arith.constant 57 : index
    %78 = vector.load %arg6[%c0_102, %c76, %c57] : memref<2x128x64xbf16, #tpu.memory_space<vmem>>, vector<2x4x7xbf16>
    tpu.vector_store %arg6[%c0_102, %c76, %c57], %77 {strides = array<i32>} : memref<2x128x64xbf16, #tpu.memory_space<vmem>>, vector<2x4x7xbf16>,
    %79 = vector.extract_strided_slice %1 {offsets = [0, 0, 7], sizes = [2, 4, 57], strides = [1, 1, 1]} : vector<2x4x64xbf16> to vector<2x4x57xbf16>
    %c0_103 = arith.constant 0 : index
    %c76_104 = arith.constant 76 : index
    %c0_105 = arith.constant 0 : index
    %80 = vector.load %arg6[%c0_103, %c76_104, %c0_105] : memref<2x128x64xbf16, #tpu.memory_space<vmem>>, vector<2x4x57xbf16>
    tpu.vector_store %arg6[%c0_103, %c76_104, %c0_105], %79 {strides = array<i32>} : memref<2x128x64xbf16, #tpu.memory_space<vmem>>, vector<2x4x57xbf16>,
    %cst_106 = arith.constant 0.000000e+00 : bf16
    %81 = vector.broadcast %cst_106 : bf16 to vector<2x4x8xbf16>
    %c0_107 = arith.constant 0 : index
    %c80 = arith.constant 80 : index
    %c56_108 = arith.constant 56 : index
    %82 = vector.load %arg6[%c0_107, %c80, %c56_108] : memref<2x128x64xbf16, #tpu.memory_space<vmem>>, vector<2x4x8xbf16>
    tpu.vector_store %arg6[%c0_107, %c80, %c56_108], %81 {strides = array<i32>} : memref<2x128x64xbf16, #tpu.memory_space<vmem>>, vector<2x4x8xbf16>,
    %83 = vector.extract_strided_slice %1 {offsets = [0, 0, 8], sizes = [2, 4, 56], strides = [1, 1, 1]} : vector<2x4x64xbf16> to vector<2x4x56xbf16>
    %c0_109 = arith.constant 0 : index
    %c80_110 = arith.constant 80 : index
    %c0_111 = arith.constant 0 : index
    %84 = vector.load %arg6[%c0_109, %c80_110, %c0_111] : memref<2x128x64xbf16, #tpu.memory_space<vmem>>, vector<2x4x56xbf16>
    tpu.vector_store %arg6[%c0_109, %c80_110, %c0_111], %83 {strides = array<i32>} : memref<2x128x64xbf16, #tpu.memory_space<vmem>>, vector<2x4x56xbf16>,
    %cst_112 = arith.constant 0.000000e+00 : bf16
    %85 = vector.broadcast %cst_112 : bf16 to vector<2x4x9xbf16>
    %c0_113 = arith.constant 0 : index
    %c84 = arith.constant 84 : index
    %c55 = arith.constant 55 : index
    %86 = vector.load %arg6[%c0_113, %c84, %c55] : memref<2x128x64xbf16, #tpu.memory_space<vmem>>, vector<2x4x9xbf16>
    tpu.vector_store %arg6[%c0_113, %c84, %c55], %85 {strides = array<i32>} : memref<2x128x64xbf16, #tpu.memory_space<vmem>>, vector<2x4x9xbf16>,
    %87 = vector.extract_strided_slice %1 {offsets = [0, 0, 9], sizes = [2, 4, 55], strides = [1, 1, 1]} : vector<2x4x64xbf16> to vector<2x4x55xbf16>
    %c0_114 = arith.constant 0 : index
    %c84_115 = arith.constant 84 : index
    %c0_116 = arith.constant 0 : index
    %88 = vector.load %arg6[%c0_114, %c84_115, %c0_116] : memref<2x128x64xbf16, #tpu.memory_space<vmem>>, vector<2x4x55xbf16>
    tpu.vector_store %arg6[%c0_114, %c84_115, %c0_116], %87 {strides = array<i32>} : memref<2x128x64xbf16, #tpu.memory_space<vmem>>, vector<2x4x55xbf16>,
    %cst_117 = arith.constant 0.000000e+00 : bf16
    %89 = vector.broadcast %cst_117 : bf16 to vector<2x4x10xbf16>
    %c0_118 = arith.constant 0 : index
    %c88 = arith.constant 88 : index
    %c54 = arith.constant 54 : index
    %90 = vector.load %arg6[%c0_118, %c88, %c54] : memref<2x128x64xbf16, #tpu.memory_space<vmem>>, vector<2x4x10xbf16>
    tpu.vector_store %arg6[%c0_118, %c88, %c54], %89 {strides = array<i32>} : memref<2x128x64xbf16, #tpu.memory_space<vmem>>, vector<2x4x10xbf16>,
    %91 = vector.extract_strided_slice %1 {offsets = [0, 0, 10], sizes = [2, 4, 54], strides = [1, 1, 1]} : vector<2x4x64xbf16> to vector<2x4x54xbf16>
    %c0_119 = arith.constant 0 : index
    %c88_120 = arith.constant 88 : index
    %c0_121 = arith.constant 0 : index
    %92 = vector.load %arg6[%c0_119, %c88_120, %c0_121] : memref<2x128x64xbf16, #tpu.memory_space<vmem>>, vector<2x4x54xbf16>
    tpu.vector_store %arg6[%c0_119, %c88_120, %c0_121], %91 {strides = array<i32>} : memref<2x128x64xbf16, #tpu.memory_space<vmem>>, vector<2x4x54xbf16>,
    %cst_122 = arith.constant 0.000000e+00 : bf16
    %93 = vector.broadcast %cst_122 : bf16 to vector<2x4x11xbf16>
    %c0_123 = arith.constant 0 : index
    %c92 = arith.constant 92 : index
    %c53 = arith.constant 53 : index
    %94 = vector.load %arg6[%c0_123, %c92, %c53] : memref<2x128x64xbf16, #tpu.memory_space<vmem>>, vector<2x4x11xbf16>
    tpu.vector_store %arg6[%c0_123, %c92, %c53], %93 {strides = array<i32>} : memref<2x128x64xbf16, #tpu.memory_space<vmem>>, vector<2x4x11xbf16>,
    %95 = vector.extract_strided_slice %1 {offsets = [0, 0, 11], sizes = [2, 4, 53], strides = [1, 1, 1]} : vector<2x4x64xbf16> to vector<2x4x53xbf16>
    %c0_124 = arith.constant 0 : index
    %c92_125 = arith.constant 92 : index
    %c0_126 = arith.constant 0 : index
    %96 = vector.load %arg6[%c0_124, %c92_125, %c0_126] : memref<2x128x64xbf16, #tpu.memory_space<vmem>>, vector<2x4x53xbf16>
    tpu.vector_store %arg6[%c0_124, %c92_125, %c0_126], %95 {strides = array<i32>} : memref<2x128x64xbf16, #tpu.memory_space<vmem>>, vector<2x4x53xbf16>,
    %cst_127 = arith.constant 0.000000e+00 : bf16
    %97 = vector.broadcast %cst_127 : bf16 to vector<2x4x12xbf16>
    %c0_128 = arith.constant 0 : index
    %c96 = arith.constant 96 : index
    %c52_129 = arith.constant 52 : index
    %98 = vector.load %arg6[%c0_128, %c96, %c52_129] : memref<2x128x64xbf16, #tpu.memory_space<vmem>>, vector<2x4x12xbf16>
    tpu.vector_store %arg6[%c0_128, %c96, %c52_129], %97 {strides = array<i32>} : memref<2x128x64xbf16, #tpu.memory_space<vmem>>, vector<2x4x12xbf16>,
    %99 = vector.extract_strided_slice %1 {offsets = [0, 0, 12], sizes = [2, 4, 52], strides = [1, 1, 1]} : vector<2x4x64xbf16> to vector<2x4x52xbf16>
    %c0_130 = arith.constant 0 : index
    %c96_131 = arith.constant 96 : index
    %c0_132 = arith.constant 0 : index
    %100 = vector.load %arg6[%c0_130, %c96_131, %c0_132] : memref<2x128x64xbf16, #tpu.memory_space<vmem>>, vector<2x4x52xbf16>
    tpu.vector_store %arg6[%c0_130, %c96_131, %c0_132], %99 {strides = array<i32>} : memref<2x128x64xbf16, #tpu.memory_space<vmem>>, vector<2x4x52xbf16>,
    %c0_133 = arith.constant 0 : index
    %c0_134 = arith.constant 0 : index
    %101 = vector.load %arg2[%c0_133, %c0_134] : memref<8x128xbf16, #tpu.memory_space<vmem>>, vector<8x128xbf16>
    %cst_135 = arith.constant 0.000000e+00 : f32
    %102 = vector.broadcast %cst_135 : f32 to vector<8x1xf32>
    %cst_136 = arith.constant 0.000000e+00 : f32
    %103 = vector.broadcast %cst_136 : f32 to vector<8x1xf32>
    %c0_137 = arith.constant 0 : index
    %c0_138 = arith.constant 0 : index
    %c0_139 = arith.constant 0 : index
    %104 = vector.load %arg6[%c0_137, %c0_138, %c0_139] : memref<2x128x64xbf16, #tpu.memory_space<vmem>>, vector<1x128x64xbf16>
    %105 = vector.shape_cast %104 : vector<1x128x64xbf16> to vector<128x64xbf16>
    %cst_140 = arith.constant dense<0.000000e+00> : vector<8x64xf32>
    %106 = tpu.matmul %101, %105, %cst_140 {dimension_numbers = #tpu.dot_dimension_numbers<[1], [0], [0], [1], [0, 0, 1, 1], [], []>} : vector<8x128xbf16>, vector<128x64xbf16>, vector<8x64xf32> -> vector<8x64xf32>
    %107 = arith.truncf %106 : vector<8x64xf32> to vector<8x64xbf16>
    %c0_141 = arith.constant 0 : index
    %c0_142 = arith.constant 0 : index
    %c0_143 = arith.constant 0 : index
    %108 = vector.load %arg3[%c0_141, %c0_142, %c0_143] : memref<2x8x64xbf16, #tpu.memory_space<vmem>>, vector<1x8x64xbf16>
    %109 = vector.shape_cast %108 : vector<1x8x64xbf16> to vector<8x64xbf16>
    %110 = vector.shape_cast %107 : vector<8x64xbf16> to vector<1x8x64xbf16>
    tpu.vector_store %arg3[%c0_141, %c0_142, %c0_143], %110 {strides = array<i32>} : memref<2x8x64xbf16, #tpu.memory_space<vmem>>, vector<1x8x64xbf16>,
    %cst_144 = arith.constant dense<0.000000e+00> : vector<8xf32>
    %111 = vector.multi_reduction <add>, %106, %cst_144 [1] : vector<8x64xf32> to vector<8xf32>
    %112 = vector.shape_cast %111 : vector<8xf32> to vector<8x1xf32>
    %113 = arith.addf %102, %112 : vector<8x1xf32>
    %114 = arith.mulf %106, %106 : vector<8x64xf32>
    %cst_145 = arith.constant dense<0.000000e+00> : vector<8xf32>
    %115 = vector.multi_reduction <add>, %114, %cst_145 [1] : vector<8x64xf32> to vector<8xf32>
    %116 = vector.shape_cast %115 : vector<8xf32> to vector<8x1xf32>
    %117 = arith.addf %103, %116 : vector<8x1xf32>
    %c1_146 = arith.constant 1 : index
    %c0_147 = arith.constant 0 : index
    %c0_148 = arith.constant 0 : index
    %118 = vector.load %arg6[%c1_146, %c0_147, %c0_148] : memref<2x128x64xbf16, #tpu.memory_space<vmem>>, vector<1x128x64xbf16>
    %119 = vector.shape_cast %118 : vector<1x128x64xbf16> to vector<128x64xbf16>
    %cst_149 = arith.constant dense<0.000000e+00> : vector<8x64xf32>
    %120 = tpu.matmul %101, %119, %cst_149 {dimension_numbers = #tpu.dot_dimension_numbers<[1], [0], [0], [1], [0, 0, 1, 1], [], []>} : vector<8x128xbf16>, vector<128x64xbf16>, vector<8x64xf32> -> vector<8x64xf32>
    %121 = arith.truncf %120 : vector<8x64xf32> to vector<8x64xbf16>
    %c1_150 = arith.constant 1 : index
    %c0_151 = arith.constant 0 : index
    %c0_152 = arith.constant 0 : index
    %122 = vector.load %arg3[%c1_150, %c0_151, %c0_152] : memref<2x8x64xbf16, #tpu.memory_space<vmem>>, vector<1x8x64xbf16>
    %123 = vector.shape_cast %122 : vector<1x8x64xbf16> to vector<8x64xbf16>
    %124 = vector.shape_cast %121 : vector<8x64xbf16> to vector<1x8x64xbf16>
    tpu.vector_store %arg3[%c1_150, %c0_151, %c0_152], %124 {strides = array<i32>} : memref<2x8x64xbf16, #tpu.memory_space<vmem>>, vector<1x8x64xbf16>,
    %cst_153 = arith.constant dense<0.000000e+00> : vector<8xf32>
    %125 = vector.multi_reduction <add>, %120, %cst_153 [1] : vector<8x64xf32> to vector<8xf32>
    %126 = vector.shape_cast %125 : vector<8xf32> to vector<8x1xf32>
    %127 = arith.addf %113, %126 : vector<8x1xf32>
    %128 = arith.mulf %120, %120 : vector<8x64xf32>
    %cst_154 = arith.constant dense<0.000000e+00> : vector<8xf32>
    %129 = vector.multi_reduction <add>, %128, %cst_154 [1] : vector<8x64xf32> to vector<8xf32>
    %130 = vector.shape_cast %129 : vector<8xf32> to vector<8x1xf32>
    %131 = arith.addf %117, %130 : vector<8x1xf32>
    %c0_155 = arith.constant 0 : index
    %c0_156 = arith.constant 0 : index
    %c0_157 = arith.constant 0 : index
    %132 = vector.load %arg4[%c0_155, %c0_156, %c0_157] : memref<1x8x1xf32, #tpu.memory_space<vmem>>, vector<1x8x1xf32>
    %133 = vector.shape_cast %132 : vector<1x8x1xf32> to vector<8x1xf32>
    %134 = vector.shape_cast %127 : vector<8x1xf32> to vector<1x8x1xf32>
    tpu.vector_store %arg4[%c0_155, %c0_156, %c0_157], %134 {strides = array<i32>} : memref<1x8x1xf32, #tpu.memory_space<vmem>>, vector<1x8x1xf32>,
    %c0_158 = arith.constant 0 : index
    %c0_159 = arith.constant 0 : index
    %c0_160 = arith.constant 0 : index
    %135 = vector.load %arg5[%c0_158, %c0_159, %c0_160] : memref<1x8x1xf32, #tpu.memory_space<vmem>>, vector<1x8x1xf32>
    %136 = vector.shape_cast %135 : vector<1x8x1xf32> to vector<8x1xf32>
    %137 = vector.shape_cast %131 : vector<8x1xf32> to vector<1x8x1xf32>
    tpu.vector_store %arg5[%c0_158, %c0_159, %c0_160], %137 {strides = array<i32>} : memref<1x8x1xf32, #tpu.memory_space<vmem>>, vector<1x8x1xf32>,
    return
  }
  func.func @transform_0(%arg0: i32) -> (i32, i32, i32) {
    %c0_i32 = arith.constant 0 : i32
    %c0_i32_0 = arith.constant 0 : i32
    %c0_i32_1 = arith.constant 0 : i32
    return %arg0, %c0_i32, %c0_i32_0 : i32, i32, i32
  }
  func.func @transform_1(%arg0: i32) -> (i32, i32) {
    %c0_i32 = arith.constant 0 : i32
    %c0_i32_0 = arith.constant 0 : i32
    %c0_i32_1 = arith.constant 0 : i32
    return %c0_i32, %c0_i32_0 : i32, i32
  }
  func.func @transform_2(%arg0: i32) -> (i32, i32, i32) {
    %c0_i32 = arith.constant 0 : i32
    %c0_i32_0 = arith.constant 0 : i32
    %c0_i32_1 = arith.constant 0 : i32
    return %arg0, %c0_i32, %c0_i32_0 : i32, i32, i32
  }
  func.func @transform_3(%arg0: i32) -> (i32, i32, i32) {
    %c0_i32 = arith.constant 0 : i32
    %c0_i32_0 = arith.constant 0 : i32
    %c0_i32_1 = arith.constant 0 : i32
    return %arg0, %c0_i32, %c0_i32_0 : i32, i32, i32
  }
  func.func @transform_4(%arg0: i32) -> (i32, i32, i32) {
    %c0_i32 = arith.constant 0 : i32
    %c0_i32_0 = arith.constant 0 : i32
    %c0_i32_1 = arith.constant 0 : i32
    return %arg0, %c0_i32, %c0_i32_0 : i32, i32, i32
  }
}

</mosaic_0001>

<llo_original>
// kernel: conv_bn_relu.3
$region0: #{conv_bn_relu.3}
  #allocation0 [shape = 'u32[]', space=smem, size = 0x4, offset = 0x4, fixed_abs, tag = 'smem constant byte address 0x4 - core index']
  #allocation1 [shape = 'u32[144,128]{1,0:T(1,128)}', space=vmem, size = 0x12000, scoped, tag = 'internal scratch']
  %s0 = inlined_call_operand.vmem [shape: bf16[4,8,64], index: 0, kind: input, shape index: {}]
  %s1 = inlined_call_operand.vmem [shape: f32[1,8,1], index: 1, kind: input, shape index: {}]
  %s2 = inlined_call_operand.vmem [shape: f32[1,8,1], index: 2, kind: input, shape index: {}]
  %s3 = inlined_call_operand.hbm [shape: f32[4,8,64], index: 3, kind: output, shape index: {}]
  %s4 = sld [smem:[#allocation0]]
  $region45: #{conv_bn_relu.3} parent=0
    _
  %s6 = ssub.s32 1, %s4
  %s7 = scalar_select 0, %s6, %s4
  $region1: #{conv_bn_relu.3} parent=0
    #allocation2 [shape = 'u8[16384]{0}', space=vmem, size = 0x4000, scoped, tag = 'output window, operand 0']
    #allocation3 [shape = 's32[2]{0}', space=sflag, size = 0x8, scoped, tag = 'scoped memory for conv_bn_relu.3']
    %8 = vsyncpa [#allocation3], 0
    %s9 = scalar_lea.sflag [#allocation3], 1
    %10 = vsyncpa %s9, 0
    loop: start=0, step=1, limit=4
    $region2: #{conv_bn_relu.3} parent=1 // loop_pre_header
      _
    $region3: #{conv_bn_relu.3} parent=1 // loop_header
      %s12 = sphi 0, %s16
      %p13 = scmp.ge.s32.totalorder %s12, 4
      %s22 = sphi 0, %s24
      %s25 = sphi 0, %s22
      %s26 = sphi 0, %s25
      %s42 = sphi 0, %s26
      %s46 = sphi 0, %s46
      %s48 = sphi 0, %s46
      %s49 = sphi 0, %s48
      %s63 = sphi 0, %s49
      %s67 = sphi 0, %s67
      %s69 = sphi 0, %s67
      %s70 = sphi 0, %s69
      %s84 = sphi 0, %s70
      %s90 = sphi 0, %s92
      %s93 = sphi 0, %s90
      %s94 = sphi 0, %s93
      %s110 = sphi 0, %s94
    $region4: #{conv_bn_relu.3} parent=1 // loop_header_branch
      %15 = sbr.rel (%p13) target = $region8
    $region5: #{conv_bn_relu.3} parent=1 // loop_body
      %s17 = ssub.s32 %s12, 1
      %s18 = ssub.s32 %s12, 2
      %s19 = sadd.s32 %s12, 1
      %s20 = ssub.s32 %s12, %s19
      %p21 = scmp.eq.s32.totalorder %s20, 0
      %s23 = sadd.s32 %s22, 1
      %s24 = scalar_select %p21, %s22, %s23
      %p27 = pneg %p21
      %p28 = scmp.eq.s32.totalorder %s12, 1
      %p29 = por %p27, %p28
      %p30 = scmp.ne.s32.totalorder %s22, %s25
      %p31 = scmp.eq.s32.totalorder %s12, 0
      %p32 = por %p30, %p31
      %p33 = scmp.ne.s32.totalorder %s22, %s25
      %p34 = scmp.eq.s32.totalorder %s17, 1
      %p35 = por %p33, %p34
      %p36 = scmp.ne.s32.totalorder %s25, %s26
      %p37 = scmp.eq.s32.totalorder %s17, 0
      %p38 = por %p36, %p37
      %p39 = scmp.ne.s32.totalorder %s25, %s26
      %p40 = scmp.eq.s32.totalorder %s18, 1
      %p41 = por %p39, %p40
      %p43 = scmp.ne.s32.totalorder %s26, %s42
      %p44 = scmp.eq.s32.totalorder %s18, 0
      %p45 = por %p43, %p44
      %s47 = sadd.s32 %s46, 1
      %p50 = scmp.eq.s32.totalorder %s12, 1
      %p51 = scmp.ne.s32.totalorder %s46, %s48
      %p52 = scmp.eq.s32.totalorder %s12, 0
      %p53 = por %p51, %p52
      %p54 = scmp.ne.s32.totalorder %s46, %s48
      %p55 = scmp.eq.s32.totalorder %s17, 1
      %p56 = por %p54, %p55
      %p57 = scmp.ne.s32.totalorder %s48, %s49
      %p58 = scmp.eq.s32.totalorder %s17, 0
      %p59 = por %p57, %p58
      %p60 = scmp.ne.s32.totalorder %s48, %s49
      %p61 = scmp.eq.s32.totalorder %s18, 1
      %p62 = por %p60, %p61
      %p64 = scmp.ne.s32.totalorder %s49, %s63
      %p65 = scmp.eq.s32.totalorder %s18, 0
      %p66 = por %p64, %p65
      %s68 = sadd.s32 %s67, 1
      %p71 = scmp.eq.s32.totalorder %s12, 1
      %p72 = scmp.ne.s32.totalorder %s67, %s69
      %p73 = scmp.eq.s32.totalorder %s12, 0
      %p74 = por %p72, %p73
      %p75 = scmp.ne.s32.totalorder %s67, %s69
      %p76 = scmp.eq.s32.totalorder %s17, 1
      %p77 = por %p75, %p76
      %p78 = scmp.ne.s32.totalorder %s69, %s70
      %p79 = scmp.eq.s32.totalorder %s17, 0
      %p80 = por %p78, %p79
      %p81 = scmp.ne.s32.totalorder %s69, %s70
      %p82 = scmp.eq.s32.totalorder %s18, 1
      %p83 = por %p81, %p82
      %p85 = scmp.ne.s32.totalorder %s70, %s84
      %p86 = scmp.eq.s32.totalorder %s18, 0
      %p87 = por %p85, %p86
      %s88 = ssub.s32 %s12, %s19
      %p89 = scmp.eq.s32.totalorder %s88, 0
      %s91 = sadd.s32 %s90, 1
      %s92 = scalar_select %p89, %s90, %s91
      %p95 = pneg %p89
      %p96 = scmp.eq.s32.totalorder %s12, 1
      %p97 = por %p95, %p96
      %p98 = scmp.ne.s32.totalorder %s90, %s93
      %p99 = scmp.eq.s32.totalorder %s12, 0
      %p100 = por %p98, %p99
      %p101 = scmp.ne.s32.totalorder %s90, %s93
      %p102 = scmp.eq.s32.totalorder %s17, 1
      %p103 = por %p101, %p102
      %p104 = scmp.ne.s32.totalorder %s93, %s94
      %p105 = scmp.eq.s32.totalorder %s17, 0
      %p106 = por %p104, %p105
      %p107 = scmp.ne.s32.totalorder %s93, %s94
      %p108 = scmp.eq.s32.totalorder %s18, 1
      %p109 = por %p107, %p108
      %p111 = scmp.ne.s32.totalorder %s94, %s110
      %p112 = scmp.eq.s32.totalorder %s18, 0
      %p113 = por %p111, %p112
      %p114 = scmp.le.s32.totalorder 1, %s12
      %p115 = scmp.lt.s32.totalorder %s12, 3
      %p116 = pnand %p114, %p115
      %p117 = pneg %p116
      // Predicated region
      $region9: #{conv_bn_relu.3} parent=5 // pred_check
        _
      $region10: #{conv_bn_relu.3} parent=5 // pred_check_branch
        %119 = sbr.rel (%p116) target = $region12
      $region11: #{conv_bn_relu.3} parent=5 // pred_region
        %s120 = ssub.s32 %s12, 1
        // Predicated region
        $region13: #{conv_bn_relu.3} parent=11 // pred_check
          %p121 = pneg %p59
        $region14: #{conv_bn_relu.3} parent=11 // pred_check_branch
          %123 = sbr.rel (%p121) target = $region16
        $region15: #{conv_bn_relu.3} parent=11 // pred_region
          _
        $region16: #{conv_bn_relu.3} parent=11 // pred_fallthru
          _
        // Predicated region
        $region17: #{conv_bn_relu.3} parent=11 // pred_check
          %p124 = pneg %p80
        $region18: #{conv_bn_relu.3} parent=11 // pred_check_branch
          %126 = sbr.rel (%p124) target = $region20
        $region19: #{conv_bn_relu.3} parent=11 // pred_region
          _
        $region20: #{conv_bn_relu.3} parent=11 // pred_fallthru
          _
      $region12: #{conv_bn_relu.3} parent=5 // pred_fallthru
        _
      %p127 = scmp.lt.s32.totalorder %s12, 2
      // Predicated region
      $region21: #{conv_bn_relu.3} parent=5 // pred_check
        %p128 = pneg %p127
      $region22: #{conv_bn_relu.3} parent=5 // pred_check_branch
        %130 = sbr.rel (%p128) target = $region24
      $region23: #{conv_bn_relu.3} parent=5 // pred_region
        // Predicated region
        $region25: #{conv_bn_relu.3} parent=23 // pred_check
          %p131 = pneg %p32
        $region26: #{conv_bn_relu.3} parent=23 // pred_check_branch
          %133 = sbr.rel (%p131) target = $region28
        $region27: #{conv_bn_relu.3} parent=23 // pred_region
          %s134 = smul.u32 2, %s12
          %p135 = scmp.lt.s32.totalorder %s134, 3
          %s136 = scalar_select %p135, %s134, 3
          %s137 = smul.addr %s136, 4
          %s138 = scalar_lea.vmem %s0, %s137
          %s139 = smul.u32 2, %s12
        $region28: #{conv_bn_relu.3} parent=23 // pred_fallthru
          _
      $region24: #{conv_bn_relu.3} parent=5 // pred_fallthru
        _
      %p140 = scmp.le.s32.totalorder 1, %s12
      %p141 = scmp.lt.s32.totalorder %s12, 3
      %p142 = pnand %p140, %p141
      %p143 = pneg %p142
      // Predicated region
      $region29: #{conv_bn_relu.3} parent=5 // pred_check
        _
      $region30: #{conv_bn_relu.3} parent=5 // pred_check_branch
        %145 = sbr.rel (%p142) target = $region32
      $region31: #{conv_bn_relu.3} parent=5 // pred_region
        %s146 = ssub.s32 %s12, 1
        %s147 = smul.u32 2, %s17
        %p148 = scmp.lt.s32.totalorder %s147, 3
        %s149 = scalar_select %p148, %s147, 3
        %s150 = smul.addr %s149, 4
        %s151 = scalar_lea.vmem %s0, %s150
        %p152 = pneg %p38
        %p153 = pneg %p35
        %p154 = pneg %p59
        %p155 = pneg %p56
        %p156 = pneg %p80
        %p157 = pneg %p77
        %p158 = pneg %p106
        %p159 = pneg %p103
        %s160 = sand.u32 %s93, 1
        %s161 = scalar_lea.sflag [#allocation3], %s160
        %s162 = sand.u32 %s93, 1
        %s163 = smul.addr %s162, 16
        %s164 = scalar_lea.vmem [#allocation2], %s163
        %s165 = smul.u32 2, %s17
        %p166 = scmp.lt.s32.totalorder %s165, 3
        %s167 = scalar_select %p166, %s165, 3
        %s168 = smul.addr %s167, 4
        %s169 = scalar_lea.vmem %s0, %s168
        %s170 = smul.u32 2, %s17
        %s171 = smul.u32 2, %s17
        %v172 = vld [vmem:[%s169] sm:$0xf]
        %v173 = vld [vmem:[%s169 + $0x4] sm:$0xf]
        %v174 = vunpack.c.l.bf16 %v172
        %v175 = vunpack.c.l.bf16 %v173
        %v176 = vld [vmem:[%s1] sm:$0xff]
        %178 = vset.pattern.permute.xlu0 0
        %179 = vperm.xlu0 %178, %v176
        %v180 = vpop.permute.xlu0 %179
        %v182 = vmul.f32 %v174, %v180
        %v183 = vmul.f32 %v175, %v180
        %v184 = vld [vmem:[%s2] sm:$0xff]
        %186 = vset.pattern.permute.xlu0 0
        %187 = vperm.xlu0 %186, %v184
        %v188 = vpop.permute.xlu0 %187
        %v190 = vadd.f32 %v182, %v188
        %v191 = vadd.f32 %v183, %v188
        %v192 = vmax.f32 %v190, 0.0
        %v193 = vmax.f32 %v191, 0.0
        %vm194 = vcmask 523264
        %195 = vst.msk [vmem:[%s164] sm:$0xff] %vm194, %v192
        %196 = vst.msk [vmem:[%s164 + $0x8] sm:$0xff] %vm194, %v193
        %s197 = sand.u32 %s93, 1
        %s198 = scalar_lea.sflag [#allocation3], %s197
        %s199 = sand.u32 %s93, 1
        %s200 = smul.addr %s199, 16
        %s201 = scalar_lea.vmem [#allocation2], %s200
        // Predicated region
        $region33: #{conv_bn_relu.3} parent=31 // pred_check
          %p202 = pneg %p103
        $region34: #{conv_bn_relu.3} parent=31 // pred_check_branch
          %204 = sbr.rel (%p202) target = $region36
        $region35: #{conv_bn_relu.3} parent=31 // pred_region
          %s205 = smul.u32 2, %s17
          %s207 = ssub.s32 256, 256
          %208 = vsyncadd %s198, %s207
          %s209 = smul.addr %s205, 128
          %s210 = scalar_lea.hbm %s3, %s209
          %s211 = sshll.u32 %s201, 4
          %s212 = int_to_ptr.vmem [resolvable:$true] %s211
          %217 = dma.vmem_to_hbm [thread:$0]  %s212, 256, %s210, %s198, 128, 128, 8
        $region36: #{conv_bn_relu.3} parent=31 // pred_fallthru
          _
      $region32: #{conv_bn_relu.3} parent=5 // pred_fallthru
        _
      %p218 = scmp.le.s32.totalorder 2, %s12
      // Predicated region
      $region37: #{conv_bn_relu.3} parent=5 // pred_check
        %p219 = pneg %p218
      $region38: #{conv_bn_relu.3} parent=5 // pred_check_branch
        %221 = sbr.rel (%p219) target = $region40
      $region39: #{conv_bn_relu.3} parent=5 // pred_region
        %s222 = ssub.s32 %s12, 2
        // Predicated region
        $region41: #{conv_bn_relu.3} parent=39 // pred_check
          %p223 = pneg %p109
        $region42: #{conv_bn_relu.3} parent=39 // pred_check_branch
          %225 = sbr.rel (%p223) target = $region44
        $region43: #{conv_bn_relu.3} parent=39 // pred_region
          %s226 = sand.u32 %s94, 1
          %s227 = scalar_lea.sflag [#allocation3], %s226
          %s228 = sand.u32 %s94, 1
          %s229 = smul.addr %s228, 16
          %s230 = scalar_lea.vmem [#allocation2], %s229
          %231 = dma.done %s227, 256
        $region44: #{conv_bn_relu.3} parent=39 // pred_fallthru
          _
      $region40: #{conv_bn_relu.3} parent=5 // pred_fallthru
        _
    $region6: #{conv_bn_relu.3} parent=1 // loop_footer
      %s16 = sadd.s32 1, %s12
    $region7: #{conv_bn_relu.3} parent=1 // loop_footer_branch
      %11 = sbr.rel target = $region3
    $region8: #{conv_bn_relu.3} parent=1 // loop_exit
      _
    %232 = vsyncpa [#allocation3], 1
    %s233 = scalar_lea.sflag [#allocation3], 1
    %234 = vsyncpa %s233, 1

// kernel: conv_bn_relu.2
$region0: #{conv_bn_relu.2}
  #allocation0 [shape = 'u32[]', space=smem, size = 0x4, offset = 0x4, fixed_abs, tag = 'smem constant byte address 0x4 - core index']
  #allocation1 [shape = 'u32[144,128]{1,0:T(1,128)}', space=vmem, size = 0x12000, scoped, tag = 'internal scratch']
  #allocation2 [shape = 'bf16[2,128,64]{2,1,0:T(8,128)(2,1)}', space=vmem, size = 0x10000, scoped, tag = 'scratch operand']
  %s0 = inlined_call_operand.vmem [shape: f32[4,4,64], index: 0, kind: input, shape index: {}]
  %s1 = inlined_call_operand.vmem [shape: bf16[8,128], index: 1, kind: input, shape index: {}]
  %s2 = inlined_call_operand.vmem [shape: bf16[4,8,64], index: 2, kind: output, shape index: {0}]
  %s3 = inlined_call_operand.vmem [shape: f32[2,8,1], index: 3, kind: output, shape index: {1}]
  %s4 = inlined_call_operand.vmem [shape: f32[2,8,1], index: 4, kind: output, shape index: {2}]
  %5 = xla_tuple %s2, %s3, %s4
  %s6 = sld [smem:[#allocation0]]
  $region57: #{conv_bn_relu.2} parent=0
    _
  %s8 = ssub.s32 1, %s6
  %s9 = scalar_select 0, %s8, %s6
  loop: start=0, step=1, limit=4
  $region2: #{conv_bn_relu.2} parent=0 // loop_pre_header
    _
  $region3: #{conv_bn_relu.2} parent=0 // loop_header
    %s11 = sphi 0, %s15
    %p12 = scmp.ge.s32.totalorder %s11, 4
    %s21 = sphi 0, %s23
    %s24 = sphi 0, %s21
    %s25 = sphi 0, %s24
    %s41 = sphi 0, %s25
    %s45 = sphi 0, %s45
    %s47 = sphi 0, %s45
    %s48 = sphi 0, %s47
    %s62 = sphi 0, %s48
    %s68 = sphi 0, %s70
    %s71 = sphi 0, %s68
    %s72 = sphi 0, %s71
    %s88 = sphi 0, %s72
    %s94 = sphi 0, %s96
    %s97 = sphi 0, %s94
    %s98 = sphi 0, %s97
    %s114 = sphi 0, %s98
    %s120 = sphi 0, %s122
    %s123 = sphi 0, %s120
    %s124 = sphi 0, %s123
    %s140 = sphi 0, %s124
  $region4: #{conv_bn_relu.2} parent=0 // loop_header_branch
    %14 = sbr.rel (%p12) target = $region8
  $region5: #{conv_bn_relu.2} parent=0 // loop_body
    %s16 = ssub.s32 %s11, 1
    %s17 = ssub.s32 %s11, 2
    %s18 = sadd.s32 %s11, 1
    %s19 = ssub.s32 %s11, %s18
    %p20 = scmp.eq.s32.totalorder %s19, 0
    %s22 = sadd.s32 %s21, 1
    %s23 = scalar_select %p20, %s21, %s22
    %p26 = pneg %p20
    %p27 = scmp.eq.s32.totalorder %s11, 1
    %p28 = por %p26, %p27
    %p29 = scmp.ne.s32.totalorder %s21, %s24
    %p30 = scmp.eq.s32.totalorder %s11, 0
    %p31 = por %p29, %p30
    %p32 = scmp.ne.s32.totalorder %s21, %s24
    %p33 = scmp.eq.s32.totalorder %s16, 1
    %p34 = por %p32, %p33
    %p35 = scmp.ne.s32.totalorder %s24, %s25
    %p36 = scmp.eq.s32.totalorder %s16, 0
    %p37 = por %p35, %p36
    %p38 = scmp.ne.s32.totalorder %s24, %s25
    %p39 = scmp.eq.s32.totalorder %s17, 1
    %p40 = por %p38, %p39
    %p42 = scmp.ne.s32.totalorder %s25, %s41
    %p43 = scmp.eq.s32.totalorder %s17, 0
    %p44 = por %p42, %p43
    %s46 = sadd.s32 %s45, 1
    %p49 = scmp.eq.s32.totalorder %s11, 1
    %p50 = scmp.ne.s32.totalorder %s45, %s47
    %p51 = scmp.eq.s32.totalorder %s11, 0
    %p52 = por %p50, %p51
    %p53 = scmp.ne.s32.totalorder %s45, %s47
    %p54 = scmp.eq.s32.totalorder %s16, 1
    %p55 = por %p53, %p54
    %p56 = scmp.ne.s32.totalorder %s47, %s48
    %p57 = scmp.eq.s32.totalorder %s16, 0
    %p58 = por %p56, %p57
    %p59 = scmp.ne.s32.totalorder %s47, %s48
    %p60 = scmp.eq.s32.totalorder %s17, 1
    %p61 = por %p59, %p60
    %p63 = scmp.ne.s32.totalorder %s48, %s62
    %p64 = scmp.eq.s32.totalorder %s17, 0
    %p65 = por %p63, %p64
    %s66 = ssub.s32 %s11, %s18
    %p67 = scmp.eq.s32.totalorder %s66, 0
    %s69 = sadd.s32 %s68, 1
    %s70 = scalar_select %p67, %s68, %s69
    %p73 = pneg %p67
    %p74 = scmp.eq.s32.totalorder %s11, 1
    %p75 = por %p73, %p74
    %p76 = scmp.ne.s32.totalorder %s68, %s71
    %p77 = scmp.eq.s32.totalorder %s11, 0
    %p78 = por %p76, %p77
    %p79 = scmp.ne.s32.totalorder %s68, %s71
    %p80 = scmp.eq.s32.totalorder %s16, 1
    %p81 = por %p79, %p80
    %p82 = scmp.ne.s32.totalorder %s71, %s72
    %p83 = scmp.eq.s32.totalorder %s16, 0
    %p84 = por %p82, %p83
    %p85 = scmp.ne.s32.totalorder %s71, %s72
    %p86 = scmp.eq.s32.totalorder %s17, 1
    %p87 = por %p85, %p86
    %p89 = scmp.ne.s32.totalorder %s72, %s88
    %p90 = scmp.eq.s32.totalorder %s17, 0
    %p91 = por %p89, %p90
    %s92 = ssub.s32 %s11, %s18
    %p93 = scmp.eq.s32.totalorder %s92, 0
    %s95 = sadd.s32 %s94, 1
    %s96 = scalar_select %p93, %s94, %s95
    %p99 = pneg %p93
    %p100 = scmp.eq.s32.totalorder %s11, 1
    %p101 = por %p99, %p100
    %p102 = scmp.ne.s32.totalorder %s94, %s97
    %p103 = scmp.eq.s32.totalorder %s11, 0
    %p104 = por %p102, %p103
    %p105 = scmp.ne.s32.totalorder %s94, %s97
    %p106 = scmp.eq.s32.totalorder %s16, 1
    %p107 = por %p105, %p106
    %p108 = scmp.ne.s32.totalorder %s97, %s98
    %p109 = scmp.eq.s32.totalorder %s16, 0
    %p110 = por %p108, %p109
    %p111 = scmp.ne.s32.totalorder %s97, %s98
    %p112 = scmp.eq.s32.totalorder %s17, 1
    %p113 = por %p111, %p112
    %p115 = scmp.ne.s32.totalorder %s98, %s114
    %p116 = scmp.eq.s32.totalorder %s17, 0
    %p117 = por %p115, %p116
    %s118 = ssub.s32 %s11, %s18
    %p119 = scmp.eq.s32.totalorder %s118, 0
    %s121 = sadd.s32 %s120, 1
    %s122 = scalar_select %p119, %s120, %s121
    %p125 = pneg %p119
    %p126 = scmp.eq.s32.totalorder %s11, 1
    %p127 = por %p125, %p126
    %p128 = scmp.ne.s32.totalorder %s120, %s123
    %p129 = scmp.eq.s32.totalorder %s11, 0
    %p130 = por %p128, %p129
    %p131 = scmp.ne.s32.totalorder %s120, %s123
    %p132 = scmp.eq.s32.totalorder %s16, 1
    %p133 = por %p131, %p132
    %p134 = scmp.ne.s32.totalorder %s123, %s124
    %p135 = scmp.eq.s32.totalorder %s16, 0
    %p136 = por %p134, %p135
    %p137 = scmp.ne.s32.totalorder %s123, %s124
    %p138 = scmp.eq.s32.totalorder %s17, 1
    %p139 = por %p137, %p138
    %p141 = scmp.ne.s32.totalorder %s124, %s140
    %p142 = scmp.eq.s32.totalorder %s17, 0
    %p143 = por %p141, %p142
    %p144 = scmp.le.s32.totalorder 1, %s11
    %p145 = scmp.lt.s32.totalorder %s11, 3
    %p146 = pnand %p144, %p145
    %p147 = pneg %p146
    // Predicated region
    $region9: #{conv_bn_relu.2} parent=5 // pred_check
      _
    $region10: #{conv_bn_relu.2} parent=5 // pred_check_branch
      %149 = sbr.rel (%p146) target = $region12
    $region11: #{conv_bn_relu.2} parent=5 // pred_region
      %s150 = ssub.s32 %s11, 1
      // Predicated region
      $region13: #{conv_bn_relu.2} parent=11 // pred_check
        %p151 = pneg %p58
      $region14: #{conv_bn_relu.2} parent=11 // pred_check_branch
        %153 = sbr.rel (%p151) target = $region16
      $region15: #{conv_bn_relu.2} parent=11 // pred_region
        _
      $region16: #{conv_bn_relu.2} parent=11 // pred_fallthru
        _
    $region12: #{conv_bn_relu.2} parent=5 // pred_fallthru
      _
    %p154 = scmp.lt.s32.totalorder %s11, 2
    // Predicated region
    $region17: #{conv_bn_relu.2} parent=5 // pred_check
      %p155 = pneg %p154
    $region18: #{conv_bn_relu.2} parent=5 // pred_check_branch
      %157 = sbr.rel (%p155) target = $region20
    $region19: #{conv_bn_relu.2} parent=5 // pred_region
      // Predicated region
      $region21: #{conv_bn_relu.2} parent=19 // pred_check
        %p158 = pneg %p31
      $region22: #{conv_bn_relu.2} parent=19 // pred_check_branch
        %160 = sbr.rel (%p158) target = $region24
      $region23: #{conv_bn_relu.2} parent=19 // pred_region
        %s161 = smul.u32 2, %s11
        %p162 = scmp.lt.s32.totalorder %s161, 3
        %s163 = scalar_select %p162, %s161, 3
        %s164 = smul.addr %s163, 4
        %s165 = scalar_lea.vmem %s0, %s164
        %s166 = smul.u32 2, %s11
      $region24: #{conv_bn_relu.2} parent=19 // pred_fallthru
        _
    $region20: #{conv_bn_relu.2} parent=5 // pred_fallthru
      _
    %p167 = scmp.le.s32.totalorder 1, %s11
    %p168 = scmp.lt.s32.totalorder %s11, 3
    %p169 = pnand %p167, %p168
    %p170 = pneg %p169
    // Predicated region
    $region25: #{conv_bn_relu.2} parent=5 // pred_check
      _
    $region26: #{conv_bn_relu.2} parent=5 // pred_check_branch
      %172 = sbr.rel (%p169) target = $region28
    $region27: #{conv_bn_relu.2} parent=5 // pred_region
      %s173 = ssub.s32 %s11, 1
      %s174 = smul.u32 2, %s16
      %p175 = scmp.lt.s32.totalorder %s174, 3
      %s176 = scalar_select %p175, %s174, 3
      %s177 = smul.addr %s176, 4
      %s178 = scalar_lea.vmem %s0, %s177
      %p179 = pneg %p37
      %p180 = pneg %p34
      %p181 = pneg %p58
      %p182 = pneg %p55
      %p183 = pneg %p84
      %p184 = pneg %p81
      %s185 = smul.u32 2, %s16
      %p186 = scmp.lt.s32.totalorder %s185, 3
      %s187 = scalar_select %p186, %s185, 3
      %s188 = smul.addr %s187, 4
      %s189 = scalar_lea.vmem %s2, %s188
      %p190 = pneg %p110
      %p191 = pneg %p107
      %p192 = scmp.lt.s32.totalorder %s16, 1
      %s193 = scalar_select %p192, %s16, 1
      %s194 = smul.addr %s193, 8
      %s195 = scalar_lea.vmem %s3, %s194
      %p196 = pneg %p136
      %p197 = pneg %p133
      %p198 = scmp.lt.s32.totalorder %s16, 1
      %s199 = scalar_select %p198, %s16, 1
      %s200 = smul.addr %s199, 8
      %s201 = scalar_lea.vmem %s4, %s200
      %s202 = smul.u32 2, %s16
      %p203 = scmp.lt.s32.totalorder %s202, 3
      %s204 = scalar_select %p203, %s202, 3
      %s205 = smul.addr %s204, 4
      %s206 = scalar_lea.vmem %s0, %s205
      %s207 = smul.u32 2, %s16
      %s208 = smul.u32 2, %s16
      %p209 = scmp.lt.s32.totalorder %s208, 3
      %s210 = scalar_select %p209, %s208, 3
      %s211 = smul.addr %s210, 4
      %s212 = scalar_lea.vmem %s2, %s211
      %s213 = smul.u32 2, %s16
      %p214 = scmp.lt.s32.totalorder %s16, 1
      %s215 = scalar_select %p214, %s16, 1
      %s216 = smul.addr %s215, 8
      %s217 = scalar_lea.vmem %s3, %s216
      %p218 = scmp.lt.s32.totalorder %s16, 1
      %s219 = scalar_select %p218, %s16, 1
      %s220 = smul.addr %s219, 8
      %s221 = scalar_lea.vmem %s4, %s220
      %v223 = vld [vmem:[%s206] sm:$0xf]
      %v224 = vld [vmem:[%s206 + $0x4] sm:$0xf]
      %v225 = vpack.c.bf16 %v223, %v223
      %v226 = vpack.c.bf16 %v224, %v224
      %vm227 = vcmask 519170
      %228 = vst.msk [vmem:[#allocation2 + $0x30] sm:$0xc] %vm227, 0
      %vm229 = vcmask 519168
      %230 = vst.msk [vmem:[#allocation2 + $0x34] sm:$0xf] %vm229, 0
      %231 = vst.msk [vmem:[#allocation2 + $0x38] sm:$0xf] %vm229, 0
      %232 = vst.msk [vmem:[#allocation2 + $0x3c] sm:$0xf] %vm229, 0
      %233 = vst.msk [vmem:[#allocation2 + $0x70] sm:$0xc] %vm227, 0
      %234 = vst.msk [vmem:[#allocation2 + $0x74] sm:$0xf] %vm229, 0
      %235 = vst.msk [vmem:[#allocation2 + $0x78] sm:$0xf] %vm229, 0
      %236 = vst.msk [vmem:[#allocation2 + $0x7c] sm:$0xf] %vm229, 0
      %vm237 = vcmask 91136
      %238 = vst.msk [vmem:[#allocation2] sm:$0x3] %vm237, 0
      %239 = vst.msk [vmem:[#allocation2 + $0x40] sm:$0x3] %vm237, 0
      %v242 = vunpack.c.l.b16 %v225
      %v243 = vunpack.c.l.b16 %v226
      %v244 = vpack.c.b16 %v242, %v242
      %v245 = vpack.c.b16 %v243, %v243
      %246 = vrot.lane.b32.xlu0 %v244, 12
      %v247 = vpop.permute.xlu0 %246
      %248 = vrot.lane.b32.xlu0 %v245, 12
      %v249 = vpop.permute.xlu0 %248
      %vm252 = vcmask 517216
      %253 = vst.msk [vmem:[#allocation2] sm:$0x3] %vm252, %v247
      %254 = vst.msk [vmem:[#allocation2 + $0x40] sm:$0x3] %vm252, %v249
      %vm255 = vcmask 84994
      %256 = vst.msk [vmem:[#allocation2] sm:$0xc] %vm255, 0
      %257 = vst.msk [vmem:[#allocation2 + $0x40] sm:$0xc] %vm255, 0
      %v258 = vrot.slane %v244, 6
      %v259 = vrot.slane %v245, 6
      %260 = vrot.lane.b32.xlu0 %v258, 11
      %v261 = vpop.permute.xlu0 %260
      %262 = vrot.lane.b32.xlu0 %v259, 11
      %v263 = vpop.permute.xlu0 %262
      %vm266 = vcmask 519258
      %267 = vst.msk [vmem:[#allocation2] sm:$0xc] %vm266, %v261
      %268 = vst.msk [vmem:[#allocation2 + $0x40] sm:$0xc] %vm266, %v263
      %vm269 = vcmask 74752
      %270 = vst.msk [vmem:[#allocation2 + $0x4] sm:$0x3] %vm269, 0
      %271 = vst.msk [vmem:[#allocation2 + $0x44] sm:$0x3] %vm269, 0
      %272 = vrot.lane.b32.xlu0 %v244, 10
      %v273 = vpop.permute.xlu0 %272
      %274 = vrot.lane.b32.xlu0 %v245, 10
      %v275 = vpop.permute.xlu0 %274
      %vm278 = vcmask 517200
      %279 = vst.msk [vmem:[#allocation2 + $0x4] sm:$0x3] %vm278, %v273
      %280 = vst.msk [vmem:[#allocation2 + $0x44] sm:$0x3] %vm278, %v275
      %vm281 = vcmask 68610
      %282 = vst.msk [vmem:[#allocation2 + $0x4] sm:$0xc] %vm281, 0
      %283 = vst.msk [vmem:[#allocation2 + $0x44] sm:$0xc] %vm281, 0
      %284 = vrot.lane.b32.xlu0 %v258, 9
      %v285 = vpop.permute.xlu0 %284
      %286 = vrot.lane.b32.xlu0 %v259, 9
      %v287 = vpop.permute.xlu0 %286
      %vm290 = vcmask 519242
      %291 = vst.msk [vmem:[#allocation2 + $0x4] sm:$0xc] %vm290, %v285
      %292 = vst.msk [vmem:[#allocation2 + $0x44] sm:$0xc] %vm290, %v287
      %vm293 = vcmask 58368
      %294 = vst.msk [vmem:[#allocation2 + $0x8] sm:$0x3] %vm293, 0
      %295 = vst.msk [vmem:[#allocation2 + $0x48] sm:$0x3] %vm293, 0
      %296 = vrot.lane.b32.xlu0 %v244, 8
      %v297 = vpop.permute.xlu0 %296
      %298 = vrot.lane.b32.xlu0 %v245, 8
      %v299 = vpop.permute.xlu0 %298
      %vm302 = vcmask 517184
      %303 = vst.msk [vmem:[#allocation2 + $0x8] sm:$0x3] %vm302, %v297
      %304 = vst.msk [vmem:[#allocation2 + $0x48] sm:$0x3] %vm302, %v299
      %vm305 = vcmask 52226
      %306 = vst.msk [vmem:[#allocation2 + $0x8] sm:$0xc] %vm305, 0
      %307 = vst.msk [vmem:[#allocation2 + $0x48] sm:$0xc] %vm305, 0
      %308 = vrot.lane.b32.xlu0 %v258, 7
      %v309 = vpop.permute.xlu0 %308
      %310 = vrot.lane.b32.xlu0 %v259, 7
      %v311 = vpop.permute.xlu0 %310
      %vm314 = vcmask 519226
      %315 = vst.msk [vmem:[#allocation2 + $0x8] sm:$0xc] %vm314, %v309
      %316 = vst.msk [vmem:[#allocation2 + $0x48] sm:$0xc] %vm314, %v311
      %vm317 = vcmask 41984
      %318 = vst.msk [vmem:[#allocation2 + $0xc] sm:$0x3] %vm317, 0
      %319 = vst.msk [vmem:[#allocation2 + $0x4c] sm:$0x3] %vm317, 0
      %320 = vrot.lane.b32.xlu0 %v244, 6
      %v321 = vpop.permute.xlu0 %320
      %322 = vrot.lane.b32.xlu0 %v245, 6
      %v323 = vpop.permute.xlu0 %322
      %vm326 = vcmask 517168
      %327 = vst.msk [vmem:[#allocation2 + $0xc] sm:$0x3] %vm326, %v321
      %328 = vst.msk [vmem:[#allocation2 + $0x4c] sm:$0x3] %vm326, %v323
      %vm329 = vcmask 35842
      %330 = vst.msk [vmem:[#allocation2 + $0xc] sm:$0xc] %vm329, 0
      %331 = vst.msk [vmem:[#allocation2 + $0x4c] sm:$0xc] %vm329, 0
      %332 = vrot.lane.b32.xlu0 %v258, 5
      %v333 = vpop.permute.xlu0 %332
      %334 = vrot.lane.b32.xlu0 %v259, 5
      %v335 = vpop.permute.xlu0 %334
      %vm338 = vcmask 519210
      %339 = vst.msk [vmem:[#allocation2 + $0xc] sm:$0xc] %vm338, %v333
      %340 = vst.msk [vmem:[#allocation2 + $0x4c] sm:$0xc] %vm338, %v335
      %vm341 = vcmask 25600
      %342 = vst.msk [vmem:[#allocation2 + $0x10] sm:$0x3] %vm341, 0
      %343 = vst.msk [vmem:[#allocation2 + $0x50] sm:$0x3] %vm341, 0
      %344 = vrot.lane.b32.xlu0 %v244, 4
      %v345 = vpop.permute.xlu0 %344
      %346 = vrot.lane.b32.xlu0 %v245, 4
      %v347 = vpop.permute.xlu0 %346
      %vm350 = vcmask 517152
      %351 = vst.msk [vmem:[#allocation2 + $0x10] sm:$0x3] %vm350, %v345
      %352 = vst.msk [vmem:[#allocation2 + $0x50] sm:$0x3] %vm350, %v347
      %vm353 = vcmask 19458
      %354 = vst.msk [vmem:[#allocation2 + $0x10] sm:$0xc] %vm353, 0
      %355 = vst.msk [vmem:[#allocation2 + $0x50] sm:$0xc] %vm353, 0
      %356 = vrot.lane.b32.xlu0 %v258, 3
      %v357 = vpop.permute.xlu0 %356
      %358 = vrot.lane.b32.xlu0 %v259, 3
      %v359 = vpop.permute.xlu0 %358
      %vm362 = vcmask 519194
      %363 = vst.msk [vmem:[#allocation2 + $0x10] sm:$0xc] %vm362, %v357
      %364 = vst.msk [vmem:[#allocation2 + $0x50] sm:$0xc] %vm362, %v359
      %vm365 = vcmask 9216
      %366 = vst.msk [vmem:[#allocation2 + $0x14] sm:$0x3] %vm365, 0
      %367 = vst.msk [vmem:[#allocation2 + $0x54] sm:$0x3] %vm365, 0
      %368 = vrot.lane.b32.xlu0 %v244, 2
      %v369 = vpop.permute.xlu0 %368
      %370 = vrot.lane.b32.xlu0 %v245, 2
      %v371 = vpop.permute.xlu0 %370
      %vm374 = vcmask 517136
      %375 = vst.msk [vmem:[#allocation2 + $0x14] sm:$0x3] %vm374, %v369
      %376 = vst.msk [vmem:[#allocation2 + $0x54] sm:$0x3] %vm374, %v371
      %vm377 = vcmask 3074
      %378 = vst.msk [vmem:[#allocation2 + $0x14] sm:$0xc] %vm377, 0
      %379 = vst.msk [vmem:[#allocation2 + $0x54] sm:$0xc] %vm377, 0
      %380 = vrot.lane.b32.xlu0 %v258, 1
      %v381 = vpop.permute.xlu0 %380
      %382 = vrot.lane.b32.xlu0 %v259, 1
      %v383 = vpop.permute.xlu0 %382
      %vm386 = vcmask 519178
      %387 = vst.msk [vmem:[#allocation2 + $0x14] sm:$0xc] %vm386, %v381
      %388 = vst.msk [vmem:[#allocation2 + $0x54] sm:$0xc] %vm386, %v383
      %vm389 = vcmask 517120
      %390 = vst.msk [vmem:[#allocation2 + $0x18] sm:$0x3] %vm389, %v225
      %391 = vst.msk [vmem:[#allocation2 + $0x58] sm:$0x3] %vm389, %v226
      %vm392 = vcmask 519674
      %393 = vst.msk [vmem:[#allocation2 + $0x18] sm:$0xc] %vm392, 0
      %394 = vst.msk [vmem:[#allocation2 + $0x58] sm:$0xc] %vm392, 0
      %395 = vrot.lane.b32.xlu0 %v258, 127
      %v396 = vpop.permute.xlu0 %395
      %397 = vrot.lane.b32.xlu0 %v259, 127
      %v398 = vpop.permute.xlu0 %397
      %vm401 = vcmask 510978
      %402 = vst.msk [vmem:[#allocation2 + $0x18] sm:$0xc] %vm401, %v396
      %403 = vst.msk [vmem:[#allocation2 + $0x58] sm:$0xc] %vm401, %v398
      %vm404 = vcmask 517616
      %405 = vst.msk [vmem:[#allocation2 + $0x1c] sm:$0x3] %vm404, 0
      %406 = vst.msk [vmem:[#allocation2 + $0x5c] sm:$0x3] %vm404, 0
      %407 = vrot.lane.b32.xlu0 %v244, 126
      %v408 = vpop.permute.xlu0 %407
      %409 = vrot.lane.b32.xlu0 %v245, 126
      %v410 = vpop.permute.xlu0 %409
      %vm413 = vcmask 500736
      %414 = vst.msk [vmem:[#allocation2 + $0x1c] sm:$0x3] %vm413, %v408
      %415 = vst.msk [vmem:[#allocation2 + $0x5c] sm:$0x3] %vm413, %v410
      %vm416 = vcmask 519658
      %417 = vst.msk [vmem:[#allocation2 + $0x1c] sm:$0xc] %vm416, 0
      %418 = vst.msk [vmem:[#allocation2 + $0x5c] sm:$0xc] %vm416, 0
      %419 = vrot.lane.b32.xlu0 %v258, 125
      %v420 = vpop.permute.xlu0 %419
      %421 = vrot.lane.b32.xlu0 %v259, 125
      %v422 = vpop.permute.xlu0 %421
      %vm425 = vcmask 494594
      %426 = vst.msk [vmem:[#allocation2 + $0x1c] sm:$0xc] %vm425, %v420
      %427 = vst.msk [vmem:[#allocation2 + $0x5c] sm:$0xc] %vm425, %v422
      %vm428 = vcmask 517600
      %429 = vst.msk [vmem:[#allocation2 + $0x20] sm:$0x3] %vm428, 0
      %430 = vst.msk [vmem:[#allocation2 + $0x60] sm:$0x3] %vm428, 0
      %431 = vrot.lane.b32.xlu0 %v244, 124
      %v432 = vpop.permute.xlu0 %431
      %433 = vrot.lane.b32.xlu0 %v245, 124
      %v434 = vpop.permute.xlu0 %433
      %vm437 = vcmask 484352
      %438 = vst.msk [vmem:[#allocation2 + $0x20] sm:$0x3] %vm437, %v432
      %439 = vst.msk [vmem:[#allocation2 + $0x60] sm:$0x3] %vm437, %v434
      %vm440 = vcmask 519642
      %441 = vst.msk [vmem:[#allocation2 + $0x20] sm:$0xc] %vm440, 0
      %442 = vst.msk [vmem:[#allocation2 + $0x60] sm:$0xc] %vm440, 0
      %443 = vrot.lane.b32.xlu0 %v258, 123
      %v444 = vpop.permute.xlu0 %443
      %445 = vrot.lane.b32.xlu0 %v259, 123
      %v446 = vpop.permute.xlu0 %445
      %vm449 = vcmask 478210
      %450 = vst.msk [vmem:[#allocation2 + $0x20] sm:$0xc] %vm449, %v444
      %451 = vst.msk [vmem:[#allocation2 + $0x60] sm:$0xc] %vm449, %v446
      %vm452 = vcmask 517584
      %453 = vst.msk [vmem:[#allocation2 + $0x24] sm:$0x3] %vm452, 0
      %454 = vst.msk [vmem:[#allocation2 + $0x64] sm:$0x3] %vm452, 0
      %455 = vrot.lane.b32.xlu0 %v244, 122
      %v456 = vpop.permute.xlu0 %455
      %457 = vrot.lane.b32.xlu0 %v245, 122
      %v458 = vpop.permute.xlu0 %457
      %vm461 = vcmask 467968
      %462 = vst.msk [vmem:[#allocation2 + $0x24] sm:$0x3] %vm461, %v456
      %463 = vst.msk [vmem:[#allocation2 + $0x64] sm:$0x3] %vm461, %v458
      %vm464 = vcmask 519626
      %465 = vst.msk [vmem:[#allocation2 + $0x24] sm:$0xc] %vm464, 0
      %466 = vst.msk [vmem:[#allocation2 + $0x64] sm:$0xc] %vm464, 0
      %467 = vrot.lane.b32.xlu0 %v258, 121
      %v468 = vpop.permute.xlu0 %467
      %469 = vrot.lane.b32.xlu0 %v259, 121
      %v470 = vpop.permute.xlu0 %469
      %vm473 = vcmask 461826
      %474 = vst.msk [vmem:[#allocation2 + $0x24] sm:$0xc] %vm473, %v468
      %475 = vst.msk [vmem:[#allocation2 + $0x64] sm:$0xc] %vm473, %v470
      %vm476 = vcmask 517568
      %477 = vst.msk [vmem:[#allocation2 + $0x28] sm:$0x3] %vm476, 0
      %478 = vst.msk [vmem:[#allocation2 + $0x68] sm:$0x3] %vm476, 0
      %479 = vrot.lane.b32.xlu0 %v244, 120
      %v480 = vpop.permute.xlu0 %479
      %481 = vrot.lane.b32.xlu0 %v245, 120
      %v482 = vpop.permute.xlu0 %481
      %vm485 = vcmask 451584
      %486 = vst.msk [vmem:[#allocation2 + $0x28] sm:$0x3] %vm485, %v480
      %487 = vst.msk [vmem:[#allocation2 + $0x68] sm:$0x3] %vm485, %v482
      %vm488 = vcmask 519610
      %489 = vst.msk [vmem:[#allocation2 + $0x28] sm:$0xc] %vm488, 0
      %490 = vst.msk [vmem:[#allocation2 + $0x68] sm:$0xc] %vm488, 0
      %491 = vrot.lane.b32.xlu0 %v258, 119
      %v492 = vpop.permute.xlu0 %491
      %493 = vrot.lane.b32.xlu0 %v259, 119
      %v494 = vpop.permute.xlu0 %493
      %vm497 = vcmask 445442
      %498 = vst.msk [vmem:[#allocation2 + $0x28] sm:$0xc] %vm497, %v492
      %499 = vst.msk [vmem:[#allocation2 + $0x68] sm:$0xc] %vm497, %v494
      %vm500 = vcmask 517552
      %501 = vst.msk [vmem:[#allocation2 + $0x2c] sm:$0x3] %vm500, 0
      %502 = vst.msk [vmem:[#allocation2 + $0x6c] sm:$0x3] %vm500, 0
      %503 = vrot.lane.b32.xlu0 %v244, 118
      %v504 = vpop.permute.xlu0 %503
      %505 = vrot.lane.b32.xlu0 %v245, 118
      %v506 = vpop.permute.xlu0 %505
      %vm509 = vcmask 435200
      %510 = vst.msk [vmem:[#allocation2 + $0x2c] sm:$0x3] %vm509, %v504
      %511 = vst.msk [vmem:[#allocation2 + $0x6c] sm:$0x3] %vm509, %v506
      %vm512 = vcmask 519594
      %513 = vst.msk [vmem:[#allocation2 + $0x2c] sm:$0xc] %vm512, 0
      %514 = vst.msk [vmem:[#allocation2 + $0x6c] sm:$0xc] %vm512, 0
      %515 = vrot.lane.b32.xlu0 %v258, 117
      %v516 = vpop.permute.xlu0 %515
      %517 = vrot.lane.b32.xlu0 %v259, 117
      %v518 = vpop.permute.xlu0 %517
      %vm521 = vcmask 429058
      %522 = vst.msk [vmem:[#allocation2 + $0x2c] sm:$0xc] %vm521, %v516
      %523 = vst.msk [vmem:[#allocation2 + $0x6c] sm:$0xc] %vm521, %v518
      %vm524 = vcmask 517536
      %525 = vst.msk [vmem:[#allocation2 + $0x30] sm:$0x3] %vm524, 0
      %526 = vst.msk [vmem:[#allocation2 + $0x70] sm:$0x3] %vm524, 0
      %527 = vrot.lane.b32.xlu0 %v244, 116
      %v528 = vpop.permute.xlu0 %527
      %529 = vrot.lane.b32.xlu0 %v245, 116
      %v530 = vpop.permute.xlu0 %529
      %vm533 = vcmask 418816
      %534 = vst.msk [vmem:[#allocation2 + $0x30] sm:$0x3] %vm533, %v528
      %535 = vst.msk [vmem:[#allocation2 + $0x70] sm:$0x3] %vm533, %v530
      %v536 = vld [vmem:[%s1] sm:$0xf]
      %v537 = vld [vmem:[#allocation2] sm:$0xf]
      %v538 = vld [vmem:[#allocation2 + $0x4] sm:$0xf]
      %v539 = vld [vmem:[#allocation2 + $0x8] sm:$0xf]
      %v540 = vld [vmem:[#allocation2 + $0xc] sm:$0xf]
      %v541 = vld [vmem:[#allocation2 + $0x10] sm:$0xf]
      %v542 = vld [vmem:[#allocation2 + $0x14] sm:$0xf]
      %v543 = vld [vmem:[#allocation2 + $0x18] sm:$0xf]
      %v544 = vld [vmem:[#allocation2 + $0x1c] sm:$0xf]
      %v545 = vld [vmem:[#allocation2 + $0x20] sm:$0xf]
      %v546 = vld [vmem:[#allocation2 + $0x24] sm:$0xf]
      %v547 = vld [vmem:[#allocation2 + $0x28] sm:$0xf]
      %v548 = vld [vmem:[#allocation2 + $0x2c] sm:$0xf]
      %v549 = vld [vmem:[#allocation2 + $0x30] sm:$0xf]
      %v550 = vld [vmem:[#allocation2 + $0x34] sm:$0xf]
      %v551 = vld [vmem:[#allocation2 + $0x38] sm:$0xf]
      %v552 = vld [vmem:[#allocation2 + $0x3c] sm:$0xf]
      %v569 = vunpack.c.l.b16 %v537
      %v570 = vunpack.c.l.b16 %v538
      %v571 = vunpack.c.l.b16 %v539
      %v572 = vunpack.c.l.b16 %v540
      %v573 = vunpack.c.l.b16 %v541
      %v574 = vunpack.c.l.b16 %v542
      %v575 = vunpack.c.l.b16 %v543
      %v576 = vunpack.c.l.b16 %v544
      %v577 = vunpack.c.l.b16 %v545
      %v578 = vunpack.c.l.b16 %v546
      %v579 = vunpack.c.l.b16 %v547
      %v580 = vunpack.c.l.b16 %v548
      %v581 = vunpack.c.l.b16 %v549
      %v582 = vunpack.c.l.b16 %v550
      %v583 = vunpack.c.l.b16 %v551
      %v584 = vunpack.c.l.b16 %v552
      %v585 = vpack.c.b16 %v570, %v569
      %v586 = vpack.c.b16 %v572, %v571
      %v587 = vpack.c.b16 %v574, %v573
      %v588 = vpack.c.b16 %v576, %v575
      %v589 = vpack.c.b16 %v578, %v577
      %v590 = vpack.c.b16 %v580, %v579
      %v591 = vpack.c.b16 %v582, %v581
      %v592 = vpack.c.b16 %v584, %v583
      %601 = vmatprep.subr.bf16.mxu0 0
      %602 = vmatpush1.bf16.msra.mxu0 %v592
      %603 = vmatprep.subr.bf16.mxu0 0
      %604 = vmatpush1.bf16.msra.mxu0 %v591
      %605 = vmatprep.subr.bf16.mxu0 0
      %606 = vmatpush1.bf16.msra.mxu0 %v590
      %607 = vmatprep.subr.bf16.mxu0 0
      %608 = vmatpush1.bf16.msra.mxu0 %v589
      %609 = vmatprep.subr.bf16.mxu0 0
      %610 = vmatpush1.bf16.msra.mxu0 %v588
      %611 = vmatprep.subr.bf16.mxu0 0
      %612 = vmatpush1.bf16.msra.mxu0 %v587
      %613 = vmatprep.subr.bf16.mxu0 0
      %614 = vmatpush1.bf16.msra.mxu0 %v586
      %615 = vmatprep.subr.bf16.mxu0 0
      %616 = vmatpush1.bf16.msra.mxu0 %v585
      %617 = vmatprep.subr.bf16.mxu0 0
      %618 = vmatpush2.bf16.msra.mxu0 0
      %619 = vmatprep.subr.bf16.mxu0 0
      %620 = vmatpush2.bf16.msra.mxu0 0
      %621 = vmatprep.subr.bf16.mxu0 0
      %622 = vmatpush2.bf16.msra.mxu0 0
      %623 = vmatprep.subr.bf16.mxu0 0
      %624 = vmatpush2.bf16.msra.mxu0 0
      %625 = vmatprep.subr.bf16.mxu0 0
      %626 = vmatpush2.bf16.msra.mxu0 0
      %627 = vmatprep.subr.bf16.mxu0 0
      %628 = vmatpush2.bf16.msra.mxu0 0
      %629 = vmatprep.subr.bf16.mxu0 0
      %630 = vmatpush2.bf16.msra.mxu0 0
      %631 = vmatprep.subr.bf16.mxu0 0
      %632 = vmatpush2.bf16.msra.mxu0 0
      %633 = vmatprep.mubr.bf16.mxu0 0
      %634 = vmatmul.mubr.bf16.gmra.mxu0 %v536
      %v635 = vpop.f32.mrf.mxu0
      %v636 = vadd.f32 0.0, %v635
      %v637 = vpop.f32.mrf.mxu0
      %v638 = vpop.f32.mrf.mxu0
      %v639 = vpop.f32.mrf.mxu0
      %640 = vdwg.mxu0
      %v641 = vpack.c.bf16 %v636, %v636
      %642 = vst.msk [vmem:[%s212] sm:$0xf] %vm229, %v641
      %vm643 = vcmask 523264
      %v644 = vsel %vm643, %v636, 0.0
      %645 = vadd.xlane.f32.xlu0 %v644
      %v646 = vpop.xlane.xlu0 %645
      %v647 = vadd.f32 %v646, 0.0
      %v648 = vmul.f32 %v636, %v636
      %v649 = vsel %vm643, %v648, 0.0
      %650 = vadd.xlane.f32.xlu0 %v649
      %v651 = vpop.xlane.xlu0 %650
      %v652 = vadd.f32 %v651, 0.0
      %s653 = scalar_lea.vmem [#allocation2], 64
      %v654 = vld [vmem:[%s653] sm:$0xf]
      %v655 = vld [vmem:[%s653 + $0x4] sm:$0xf]
      %v656 = vld [vmem:[%s653 + $0x8] sm:$0xf]
      %v657 = vld [vmem:[%s653 + $0xc] sm:$0xf]
      %v658 = vld [vmem:[%s653 + $0x10] sm:$0xf]
      %v659 = vld [vmem:[%s653 + $0x14] sm:$0xf]
      %v660 = vld [vmem:[%s653 + $0x18] sm:$0xf]
      %v661 = vld [vmem:[%s653 + $0x1c] sm:$0xf]
      %v662 = vld [vmem:[%s653 + $0x20] sm:$0xf]
      %v663 = vld [vmem:[%s653 + $0x24] sm:$0xf]
      %v664 = vld [vmem:[%s653 + $0x28] sm:$0xf]
      %v665 = vld [vmem:[%s653 + $0x2c] sm:$0xf]
      %v666 = vld [vmem:[%s653 + $0x30] sm:$0xf]
      %v667 = vld [vmem:[%s653 + $0x34] sm:$0xf]
      %v668 = vld [vmem:[%s653 + $0x38] sm:$0xf]
      %v669 = vld [vmem:[%s653 + $0x3c] sm:$0xf]
      %v686 = vunpack.c.l.b16 %v654
      %v687 = vunpack.c.l.b16 %v655
      %v688 = vunpack.c.l.b16 %v656
      %v689 = vunpack.c.l.b16 %v657
      %v690 = vunpack.c.l.b16 %v658
      %v691 = vunpack.c.l.b16 %v659
      %v692 = vunpack.c.l.b16 %v660
      %v693 = vunpack.c.l.b16 %v661
      %v694 = vunpack.c.l.b16 %v662
      %v695 = vunpack.c.l.b16 %v663
      %v696 = vunpack.c.l.b16 %v664
      %v697 = vunpack.c.l.b16 %v665
      %v698 = vunpack.c.l.b16 %v666
      %v699 = vunpack.c.l.b16 %v667
      %v700 = vunpack.c.l.b16 %v668
      %v701 = vunpack.c.l.b16 %v669
      %v702 = vpack.c.b16 %v687, %v686
      %v703 = vpack.c.b16 %v689, %v688
      %v704 = vpack.c.b16 %v691, %v690
      %v705 = vpack.c.b16 %v693, %v692
      %v706 = vpack.c.b16 %v695, %v694
      %v707 = vpack.c.b16 %v697, %v696
      %v708 = vpack.c.b16 %v699, %v698
      %v709 = vpack.c.b16 %v701, %v700
      %718 = vmatprep.subr.bf16.mxu0 0
      %719 = vmatpush1.bf16.msra.mxu0 %v709
      %720 = vmatprep.subr.bf16.mxu0 0
      %721 = vmatpush1.bf16.msra.mxu0 %v708
      %722 = vmatprep.subr.bf16.mxu0 0
      %723 = vmatpush1.bf16.msra.mxu0 %v707
      %724 = vmatprep.subr.bf16.mxu0 0
      %725 = vmatpush1.bf16.msra.mxu0 %v706
      %726 = vmatprep.subr.bf16.mxu0 0
      %727 = vmatpush1.bf16.msra.mxu0 %v705
      %728 = vmatprep.subr.bf16.mxu0 0
      %729 = vmatpush1.bf16.msra.mxu0 %v704
      %730 = vmatprep.subr.bf16.mxu0 0
      %731 = vmatpush1.bf16.msra.mxu0 %v703
      %732 = vmatprep.subr.bf16.mxu0 0
      %733 = vmatpush1.bf16.msra.mxu0 %v702
      %734 = vmatprep.subr.bf16.mxu0 0
      %735 = vmatpush2.bf16.msra.mxu0 0
      %736 = vmatprep.subr.bf16.mxu0 0
      %737 = vmatpush2.bf16.msra.mxu0 0
      %738 = vmatprep.subr.bf16.mxu0 0
      %739 = vmatpush2.bf16.msra.mxu0 0
      %740 = vmatprep.subr.bf16.mxu0 0
      %741 = vmatpush2.bf16.msra.mxu0 0
      %742 = vmatprep.subr.bf16.mxu0 0
      %743 = vmatpush2.bf16.msra.mxu0 0
      %744 = vmatprep.subr.bf16.mxu0 0
      %745 = vmatpush2.bf16.msra.mxu0 0
      %746 = vmatprep.subr.bf16.mxu0 0
      %747 = vmatpush2.bf16.msra.mxu0 0
      %748 = vmatprep.subr.bf16.mxu0 0
      %749 = vmatpush2.bf16.msra.mxu0 0
      %750 = vmatprep.mubr.bf16.mxu0 0
      %751 = vmatmul.mubr.bf16.gmra.mxu0 %v536
      %v752 = vpop.f32.mrf.mxu0
      %v753 = vadd.f32 0.0, %v752
      %v754 = vpop.f32.mrf.mxu0
      %v755 = vpop.f32.mrf.mxu0
      %v756 = vpop.f32.mrf.mxu0
      %757 = vdwg.mxu0
      %v758 = vpack.c.bf16 %v753, %v753
      %s759 = scalar_lea.vmem %s212, 4
      %760 = vst.msk [vmem:[%s759] sm:$0xf] %vm229, %v758
      %v761 = vsel %vm643, %v753, 0.0
      %762 = vadd.xlane.f32.xlu0 %v761
      %v763 = vpop.xlane.xlu0 %762
      %v764 = vadd.f32 %v647, %v763
      %v765 = vmul.f32 %v753, %v753
      %v766 = vsel %vm643, %v765, 0.0
      %767 = vadd.xlane.f32.xlu0 %v766
      %v768 = vpop.xlane.xlu0 %767
      %v769 = vadd.f32 %v652, %v768
      %vm770 = vcmask 7168
      %771 = vst.msk [vmem:[%s217] sm:$0xff] %vm770, %v764
      %772 = vst.msk [vmem:[%s221] sm:$0xff] %vm770, %v769
      %s773 = smul.u32 2, %s16
      %p774 = scmp.lt.s32.totalorder %s773, 3
      %s775 = scalar_select %p774, %s773, 3
      %s776 = smul.addr %s775, 4
      %s777 = scalar_lea.vmem %s2, %s776
      %p778 = scmp.lt.s32.totalorder %s16, 1
      %s779 = scalar_select %p778, %s16, 1
      %s780 = smul.addr %s779, 8
      %s781 = scalar_lea.vmem %s3, %s780
      %p782 = scmp.lt.s32.totalorder %s16, 1
      %s783 = scalar_select %p782, %s16, 1
      %s784 = smul.addr %s783, 8
      %s785 = scalar_lea.vmem %s4, %s784
      // Predicated region
      $region29: #{conv_bn_relu.2} parent=27 // pred_check
        %p786 = pneg %p81
      $region30: #{conv_bn_relu.2} parent=27 // pred_check_branch
        %788 = sbr.rel (%p786) target = $region32
      $region31: #{conv_bn_relu.2} parent=27 // pred_region
        %s789 = smul.u32 2, %s16
      $region32: #{conv_bn_relu.2} parent=27 // pred_fallthru
        _
      // Predicated region
      $region33: #{conv_bn_relu.2} parent=27 // pred_check
        %p790 = pneg %p107
      $region34: #{conv_bn_relu.2} parent=27 // pred_check_branch
        %792 = sbr.rel (%p790) target = $region36
      $region35: #{conv_bn_relu.2} parent=27 // pred_region
        _
      $region36: #{conv_bn_relu.2} parent=27 // pred_fallthru
        _
      // Predicated region
      $region37: #{conv_bn_relu.2} parent=27 // pred_check
        %p793 = pneg %p133
      $region38: #{conv_bn_relu.2} parent=27 // pred_check_branch
        %795 = sbr.rel (%p793) target = $region40
      $region39: #{conv_bn_relu.2} parent=27 // pred_region
        _
      $region40: #{conv_bn_relu.2} parent=27 // pred_fallthru
        _
    $region28: #{conv_bn_relu.2} parent=5 // pred_fallthru
      _
    %p796 = scmp.le.s32.totalorder 2, %s11
    // Predicated region
    $region41: #{conv_bn_relu.2} parent=5 // pred_check
      %p797 = pneg %p796
    $region42: #{conv_bn_relu.2} parent=5 // pred_check_branch
      %799 = sbr.rel (%p797) target = $region44
    $region43: #{conv_bn_relu.2} parent=5 // pred_region
      %s800 = ssub.s32 %s11, 2
      // Predicated region
      $region45: #{conv_bn_relu.2} parent=43 // pred_check
        %p801 = pneg %p87
      $region46: #{conv_bn_relu.2} parent=43 // pred_check_branch
        %803 = sbr.rel (%p801) target = $region48
      $region47: #{conv_bn_relu.2} parent=43 // pred_region
        %s804 = smul.u32 2, %s17
        %p805 = scmp.lt.s32.totalorder %s804, 3
        %s806 = scalar_select %p805, %s804, 3
        %s807 = smul.addr %s806, 4
        %s808 = scalar_lea.vmem %s2, %s807
      $region48: #{conv_bn_relu.2} parent=43 // pred_fallthru
        _
      // Predicated region
      $region49: #{conv_bn_relu.2} parent=43 // pred_check
        %p809 = pneg %p113
      $region50: #{conv_bn_relu.2} parent=43 // pred_check_branch
        %811 = sbr.rel (%p809) target = $region52
      $region51: #{conv_bn_relu.2} parent=43 // pred_region
        %p812 = scmp.lt.s32.totalorder %s17, 1
        %s813 = scalar_select %p812, %s17, 1
        %s814 = smul.addr %s813, 8
        %s815 = scalar_lea.vmem %s3, %s814
      $region52: #{conv_bn_relu.2} parent=43 // pred_fallthru
        _
      // Predicated region
      $region53: #{conv_bn_relu.2} parent=43 // pred_check
        %p816 = pneg %p139
      $region54: #{conv_bn_relu.2} parent=43 // pred_check_branch
        %818 = sbr.rel (%p816) target = $region56
      $region55: #{conv_bn_relu.2} parent=43 // pred_region
        %p819 = scmp.lt.s32.totalorder %s17, 1
        %s820 = scalar_select %p819, %s17, 1
        %s821 = smul.addr %s820, 8
        %s822 = scalar_lea.vmem %s4, %s821
      $region56: #{conv_bn_relu.2} parent=43 // pred_fallthru
        _
    $region44: #{conv_bn_relu.2} parent=5 // pred_fallthru
      _
  $region6: #{conv_bn_relu.2} parent=0 // loop_footer
    %s15 = sadd.s32 1, %s11
  $region7: #{conv_bn_relu.2} parent=0 // loop_footer_branch
    %10 = sbr.rel target = $region3
  $region8: #{conv_bn_relu.2} parent=0 // loop_exit
    _

</llo_original>
